<compile_context>
chip_gen: v6e
topology: v6e:2x2x1
jax: 0.10.0
libtpu: 0.0.40
codegen_flags: <defaults>
</compile_context>

<pallas_src>
import numpy as np
import jax
import jax.numpy as jnp
from jax.experimental import pallas as pl
from jax.experimental.pallas import tpu as pltpu

BN_EPS = 1e-5  # torch.nn.BatchNorm1d default

_PREP_KEYS = ("w1cat", "b1lane", "w2cat", "b2lane",
              "w1fc", "fc1_b", "bn1_g", "bn1_b",
              "w2fc", "fc2_b", "bn2_g", "bn2_b",
              "w3fc", "fc3_b")


# ------------------------- one-time weight repacking -------------------------

def prepare_params(p):
    """Host-side repack of torch-layout weights into the lane-padded Toeplitz /
    parity-split matrices the fused kernel consumes.  Batch-size independent;
    called once, not part of the per-step path.  Matmul operands -> bf16,
    biases / BN parameters stay f32."""
    f32 = np.float32
    w1 = np.asarray(p["w1"], f32)        # (6, 1, 3, 3)   OIHW
    b1 = np.asarray(p["b1"], f32)        # (6,)
    w2 = np.asarray(p["w2"], f32)        # (16, 6, 5, 5)  OIHW
    b2 = np.asarray(p["b2"], f32)        # (16,)
    fc1_w = np.asarray(p["fc1_w"], f32)  # (120, 400)
    fc2_w = np.asarray(p["fc2_w"], f32)  # (84, 120)
    fc3_w = np.asarray(p["fc3_w"], f32)  # (10, 84)

    C1, C2 = 6, 16
    OW1, OW2 = 30, 11  # conv1 / conv2 output widths

    # conv1: deep-K Toeplitz, K = 3 kernel rows * 32 padded cols (-> 128 lanes).
    # Output lane layout is ow-parity split so 2x2 width pooling is
    # max(y[:, :128], y[:, 128:]):  lane(ow, co) = (ow % 2)*128 + (ow // 2)*6 + co.
    w1cat = np.zeros((128, 256), f32)
    b1lane = np.zeros((1, 256), f32)
    for ow in range(OW1):
        lo = (ow % 2) * 128 + (ow // 2) * C1
        b1lane[0, lo:lo + C1] = b1
        for ki in range(3):
            for kj in range(3):
                w1cat[ki * 32 + ow + kj, lo:lo + C1] = w1[:, 0, ki, kj]

    # conv2: deep-K Toeplitz, K = 5 kernel rows * 128 lanes.  Input lane layout
    # is the pool1 layout (wi*6 + c); output lanes are ow2-parity split:
    # lane(ow2, co) = (ow2 % 2)*128 + (ow2 // 2)*16 + co.
    w2cat = np.zeros((5 * 128, 256), f32)
    b2lane = np.zeros((1, 256), f32)
    for ow2 in range(OW2):
        lo = (ow2 % 2) * 128 + (ow2 // 2) * C2
        b2lane[0, lo:lo + C2] = b2
        for ki in range(5):
            for kj in range(5):
                r = ki * 128 + (ow2 + kj) * C1
                w2cat[r:r + C1, lo:lo + C2] = w2[:, :, ki, kj].T  # (c, co)

    # fc1 with the torch NCHW flatten folded in.  The kernel's flattened lane is
    # h*128 + w*16 + c; torch's x.view index is c*25 + h*5 + w.
    w1fc = np.zeros((5 * 128, 128), f32)
    for h in range(5):
        for w in range(5):
            for c in range(C2):
                w1fc[h * 128 + w * C2 + c, :120] = fc1_w[:, c * 25 + h * 5 + w]

    w2fc = np.zeros((128, 128), f32)
    w2fc[:120, :84] = fc2_w.T
    w3fc = np.zeros((128, 128), f32)
    w3fc[:84, :10] = fc3_w.T

    def pad_row(v, n):
        out = np.zeros((1, n), f32)
        v = np.asarray(v, f32).reshape(-1)
        out[0, :v.shape[0]] = v
        return out

    bf16 = jnp.bfloat16
    prepped = {
        "w1cat": jnp.asarray(w1cat, bf16), "b1lane": jnp.asarray(b1lane),
        "w2cat": jnp.asarray(w2cat, bf16), "b2lane": jnp.asarray(b2lane),
        "w1fc": jnp.asarray(w1fc, bf16),
        "fc1_b": jnp.asarray(pad_row(p["fc1_b"], 128)),
        "bn1_g": jnp.asarray(pad_row(p["bn1_g"], 128)),
        "bn1_b": jnp.asarray(pad_row(p["bn1_b"], 128)),
        "w2fc": jnp.asarray(w2fc, bf16),
        "fc2_b": jnp.asarray(pad_row(p["fc2_b"], 128)),
        "bn2_g": jnp.asarray(pad_row(p["bn2_g"], 128)),
        "bn2_b": jnp.asarray(pad_row(p["bn2_b"], 128)),
        "w3fc": jnp.asarray(w3fc, bf16),
        "fc3_b": jnp.asarray(pad_row(p["fc3_b"], 128)),
    }
    return prepped


# ------------------------------ fused kernel --------------------------------

def _lenet_fused_kernel(a1_ref, w1c_ref, b1_ref, w2c_ref, b2_ref,
                        w1f_ref, f1b_ref, g1_ref, be1_ref,
                        w2f_ref, f2b_ref, g2_ref, be2_ref,
                        w3f_ref, f3b_ref, out_ref):
    n = a1_ref.shape[0] // 32  # batch (a1 rows = 2 parities * 16 rows * n images)

    def mm(a, b):
        return jnp.dot(a, b, preferred_element_type=jnp.float32)

    def bn_relu(z, g, b):  # training-mode BatchNorm1d + ReLU, all f32
        mu = jnp.mean(z, axis=0, keepdims=True)
        var = jnp.mean((z - mu) * (z - mu), axis=0, keepdims=True)
        return jnp.maximum((z - mu) * jax.lax.rsqrt(var + BN_EPS) * g + b, 0.0)

    # ---- conv1 (3x3, pad=2) + bias + ReLU: ONE deep-K Toeplitz matmul ----
    y1 = jnp.maximum(mm(a1_ref[...], w1c_ref[...]) + b1_ref[...], 0.0)  # (32n, 256)

    # ---- pool1 2x2: row pairs = the two parity halves (wrapper row order),
    #      width pairs = the ow-parity lane split.  Pure VPU maxes. ----
    rmax = jnp.maximum(y1[:16 * n, :], y1[16 * n:, :])       # row = ho*n + img
    p1 = jnp.maximum(rmax[:, :128], rmax[:, 128:])           # (16n, 128) f32

    # ---- conv2 (5x5 valid) + bias + ReLU: aligned row-window concat -> one
    #      deep-K (K=640) matmul.  Output row = oh*n + img, oh in [0, 10). ----
    p1cat = jnp.concatenate(
        [p1[ki * n: ki * n + 10 * n, :] for ki in range(5)],
        axis=1).astype(jnp.bfloat16)                          # (10n, 640)
    y2 = jnp.maximum(mm(p1cat, w2c_ref[...]) + b2_ref[...], 0.0)  # (10n, 256)

    # ---- pool2 2x2 + torch-NCHW flatten: row pairs are adjacent n-row blocks,
    #      width pairs are the ow2-parity lane split; flatten order is folded
    #      into w1fc host-side, so this is just a lane concat. ----
    groups = []
    for h in range(5):
        m = jnp.maximum(y2[2 * h * n:(2 * h + 1) * n, :],
                        y2[(2 * h + 1) * n:(2 * h + 2) * n, :])
        groups.append(jnp.maximum(m[:, :128], m[:, 128:]))
    flat = jnp.concatenate(groups, axis=1).astype(jnp.bfloat16)   # (n, 640)

    # ---- fc1 + BN + ReLU, fc2 + BN + ReLU, fc3 ----
    z = bn_relu(mm(flat, w1f_ref[...]) + f1b_ref[...], g1_ref[...], be1_ref[...])
    z = bn_relu(mm(z.astype(jnp.bfloat16), w2f_ref[...]) + f2b_ref[...],
                g2_ref[...], be2_ref[...])
    out_ref[...] = mm(z.astype(jnp.bfloat16), w3f_ref[...]) + f3b_ref[...]


def _full_spec(shape):
    nd = len(shape)
    return pl.BlockSpec(shape, lambda i, _nd=nd: (0,) * _nd)


def lenet_forward(x_nchw, prepped):
    n = x_nchw.shape[0]
    assert x_nchw.shape[1:] == (1, 28, 28), "LeNet fc1=400 implies 28x28 inputs"
    x = jnp.asarray(x_nchw, jnp.float32).reshape(n, 28, 28)

    # Wrapper-side input prep (cheap XLA on ~100 KB, per perf review): zero-pad
    # (Conv2d padding=2), build the 3 kernel-row Toeplitz windows, and order
    # rows as (output-row parity, output row, image) so in-kernel row pooling
    # is an aligned max of the two halves.  Cast to bf16 for the MXU.
    xp = jnp.pad(x, ((0, 0), (2, 2), (2, 2)))                    # (n, 32, 32)
    xp2d = jnp.pad(xp.reshape(n * 32, 32), ((0, 2), (0, 0)))     # (n*32+2, 32)
    x1cat = jnp.concatenate([xp2d[ki:ki + n * 32, :] for ki in range(3)], axis=1)
    a1op = jnp.transpose(x1cat.reshape(n, 16, 2, 96), (2, 1, 0, 3))
    a1op = a1op.reshape(2 * 16 * n, 96)
    a1op = jnp.pad(a1op, ((0, 0), (0, 32))).astype(jnp.bfloat16)  # (32n, 128)

    args = [a1op] + [prepped[k] for k in _PREP_KEYS]
    out = pl.pallas_call(
        _lenet_fused_kernel,
        out_shape=jax.ShapeDtypeStruct((n, 128), jnp.float32),
        grid=(1,),
        in_specs=[_full_spec(tuple(a.shape)) for a in args],
        out_specs=_full_spec((n, 128)),
        compiler_params=pltpu.CompilerParams(
            dimension_semantics=("arbitrary",),
            # actual footprint ~2 MB at batch 8; explicit cap per perf review
            vmem_limit_bytes=32 * 1024 * 1024),
    )(*args)
    return out[:, :10]


# --------------------------- parameters / reference -------------------------

def init_params(key):
    ks = jax.random.split(key, 10)

    def rn(k, shape, scale):
        return (scale * jax.random.normal(k, shape)).astype(jnp.float32)

    return {
        "w1": rn(ks[0], (6, 1, 3, 3), 0.3),
        "b1": rn(ks[1], (6,), 0.1),
        "w2": rn(ks[2], (16, 6, 5, 5), 0.1),
        "b2": rn(ks[3], (16,), 0.1),
        "fc1_w": rn(ks[4], (120, 400), 0.05),
        "fc1_b": rn(ks[5], (120,), 0.05),
        "bn1_g": jnp.ones((120,), jnp.float32),
        "bn1_b": jnp.zeros((120,), jnp.float32),
        "fc2_w": rn(ks[6], (84, 120), 0.05),
        "fc2_b": rn(ks[7], (84,), 0.05),
        "bn2_g": jnp.ones((84,), jnp.float32),
        "bn2_b": jnp.zeros((84,), jnp.float32),
        "fc3_w": rn(ks[8], (10, 84), 0.1),
        "fc3_b": rn(ks[9], (10,), 0.1),
    }


def ref_forward(x, p):
    """Pure-JAX reference matching the PyTorch module (training-mode BN)."""
    hp = jax.lax.Precision.HIGHEST

    def pool(y):  # NCHW, 2x2 stride 2
        N, C, H, W = y.shape
        Ho, Wo = H // 2, W // 2
        y = y[:, :, : 2 * Ho, : 2 * Wo]
        return y.reshape(N, C, Ho, 2, Wo, 2).max(axis=(3, 5))

    def bn_relu(y, g, b):
        mu = y.mean(axis=0, keepdims=True)
        var = ((y - mu) ** 2).mean(axis=0, keepdims=True)
        return jnp.maximum((y - mu) / jnp.sqrt(var + BN_EPS) * g + b, 0.0)

    dn = ("NCHW", "OIHW", "NCHW")
    y = jax.lax.conv_general_dilated(x, p["w1"], (1, 1), ((2, 2), (2, 2)),
                                     dimension_numbers=dn, precision=hp)
    y = jnp.maximum(y + p["b1"][None, :, None, None], 0.0)
    y = pool(y)
    y = jax.lax.conv_general_dilated(y, p["w2"], (1, 1), ((0, 0), (0, 0)),
                                     dimension_numbers=dn, precision=hp)
    y = jnp.maximum(y + p["b2"][None, :, None, None], 0.0)
    y = pool(y)
    y = y.reshape(y.shape[0], -1)
    y = bn_relu(jnp.dot(y, p["fc1_w"].T, precision=hp) + p["fc1_b"],
                p["bn1_g"], p["bn1_b"])
    y = bn_relu(jnp.dot(y, p["fc2_w"].T, precision=hp) + p["fc2_b"],
                p["bn2_g"], p["bn2_b"])
    return jnp.dot(y, p["fc3_w"].T, precision=hp) + p["fc3_b"]


if __name__ == "__main__":
    key = jax.random.PRNGKey(0)
    kx, kp = jax.random.split(key)
    # batch=8: BN batch stats over 8 samples and per-image row blocks that are
    # multiples of the 8-sublane tile.  LeNet's fc1 (16*5*5=400) implies 28x28.
    batch = 8
    x = jax.random.normal(kx, (batch, 1, 28, 28), dtype=jnp.float32)
    params = init_params(kp)
    prepped = prepare_params(params)  # one-time host-side weight repack

    fwd = jax.jit(lenet_forward)
    out = jax.block_until_ready(fwd(x, prepped))
    assert out.shape == (batch, 10) and out.dtype == jnp.float32

    ref = ref_forward(x, params)
    # Tolerance re-derived for bf16 MXU operands (perf-review change): per-operand
    # roundoff 2^-9 rms across 5 chained matmul stages (K up to 640) plus the
    # batch-stat BatchNorm rescaling gives final |err| ~1e-2 worst case at these
    # activation scales; assert with margin.
    np.testing.assert_allclose(np.asarray(out), np.asarray(ref),
                               rtol=5e-2, atol=5e-2)
    print("KERNEL_OK")
</pallas_src>

<mosaic_0001>
module attributes {stable_mosaic.version = 11 : i64} {
  func.func @_lenet_fused_kernel(%arg0: i32, %arg1: memref<256x128xbf16, #tpu.memory_space<vmem>>, %arg2: memref<128x256xbf16, #tpu.memory_space<vmem>>, %arg3: memref<1x256xf32, #tpu.memory_space<vmem>>, %arg4: memref<640x256xbf16, #tpu.memory_space<vmem>>, %arg5: memref<1x256xf32, #tpu.memory_space<vmem>>, %arg6: memref<640x128xbf16, #tpu.memory_space<vmem>>, %arg7: memref<1x128xf32, #tpu.memory_space<vmem>>, %arg8: memref<1x128xf32, #tpu.memory_space<vmem>>, %arg9: memref<1x128xf32, #tpu.memory_space<vmem>>, %arg10: memref<128x128xbf16, #tpu.memory_space<vmem>>, %arg11: memref<1x128xf32, #tpu.memory_space<vmem>>, %arg12: memref<1x128xf32, #tpu.memory_space<vmem>>, %arg13: memref<1x128xf32, #tpu.memory_space<vmem>>, %arg14: memref<128x128xbf16, #tpu.memory_space<vmem>>, %arg15: memref<1x128xf32, #tpu.memory_space<vmem>>, %arg16: memref<8x128xf32, #tpu.memory_space<vmem>>) attributes {dimension_semantics = [#tpu.dimension_semantics<arbitrary>], iteration_bounds = array<i64: 1>, scalar_prefetch = 0 : i64, scratch_operands = 0 : i64, tpu.core_type = #tpu.core_type<tc>, window_params = [{pipeline_mode = #tpu.pipeline_mode<synchronous>, transform_indices = @transform_0, window_bounds = array<i64: 256, 128>}, {pipeline_mode = #tpu.pipeline_mode<synchronous>, transform_indices = @transform_1, window_bounds = array<i64: 128, 256>}, {pipeline_mode = #tpu.pipeline_mode<synchronous>, transform_indices = @transform_2, window_bounds = array<i64: 1, 256>}, {pipeline_mode = #tpu.pipeline_mode<synchronous>, transform_indices = @transform_3, window_bounds = array<i64: 640, 256>}, {pipeline_mode = #tpu.pipeline_mode<synchronous>, transform_indices = @transform_4, window_bounds = array<i64: 1, 256>}, {pipeline_mode = #tpu.pipeline_mode<synchronous>, transform_indices = @transform_5, window_bounds = array<i64: 640, 128>}, {pipeline_mode = #tpu.pipeline_mode<synchronous>, transform_indices = @transform_6, window_bounds = array<i64: 1, 128>}, {pipeline_mode = #tpu.pipeline_mode<synchronous>, transform_indices = @transform_7, window_bounds = array<i64: 1, 128>}, {pipeline_mode = #tpu.pipeline_mode<synchronous>, transform_indices = @transform_8, window_bounds = array<i64: 1, 128>}, {pipeline_mode = #tpu.pipeline_mode<synchronous>, transform_indices = @transform_9, window_bounds = array<i64: 128, 128>}, {pipeline_mode = #tpu.pipeline_mode<synchronous>, transform_indices = @transform_10, window_bounds = array<i64: 1, 128>}, {pipeline_mode = #tpu.pipeline_mode<synchronous>, transform_indices = @transform_11, window_bounds = array<i64: 1, 128>}, {pipeline_mode = #tpu.pipeline_mode<synchronous>, transform_indices = @transform_12, window_bounds = array<i64: 1, 128>}, {pipeline_mode = #tpu.pipeline_mode<synchronous>, transform_indices = @transform_13, window_bounds = array<i64: 128, 128>}, {pipeline_mode = #tpu.pipeline_mode<synchronous>, transform_indices = @transform_14, window_bounds = array<i64: 1, 128>}, {pipeline_mode = #tpu.pipeline_mode<synchronous>, transform_indices = @transform_15, window_bounds = array<i64: 8, 128>}]} {
    %c0 = arith.constant 0 : index
    %c0_0 = arith.constant 0 : index
    %0 = vector.load %arg1[%c0, %c0_0] : memref<256x128xbf16, #tpu.memory_space<vmem>>, vector<256x128xbf16>
    %c0_1 = arith.constant 0 : index
    %c0_2 = arith.constant 0 : index
    %1 = vector.load %arg2[%c0_1, %c0_2] : memref<128x256xbf16, #tpu.memory_space<vmem>>, vector<128x256xbf16>
    %cst = arith.constant dense<0.000000e+00> : vector<256x256xf32>
    %2 = tpu.matmul %0, %1, %cst {dimension_numbers = #tpu.dot_dimension_numbers<[1], [0], [0], [1], [0, 0, 1, 1], [], []>} : vector<256x128xbf16>, vector<128x256xbf16>, vector<256x256xf32> -> vector<256x256xf32>
    %c0_3 = arith.constant 0 : index
    %c0_4 = arith.constant 0 : index
    %3 = vector.load %arg3[%c0_3, %c0_4] : memref<1x256xf32, #tpu.memory_space<vmem>>, vector<1x256xf32>
    %4 = vector.broadcast %3 : vector<1x256xf32> to vector<256x256xf32>
    %5 = arith.addf %2, %4 : vector<256x256xf32>
    %cst_5 = arith.constant 0.000000e+00 : f32
    %6 = vector.broadcast %cst_5 : f32 to vector<256x256xf32>
    %7 = arith.maximumf %5, %6 : vector<256x256xf32>
    %8 = vector.extract_strided_slice %7 {offsets = [0, 0], sizes = [128, 256], strides = [1, 1]} : vector<256x256xf32> to vector<128x256xf32>
    %9 = vector.extract_strided_slice %7 {offsets = [128, 0], sizes = [128, 256], strides = [1, 1]} : vector<256x256xf32> to vector<128x256xf32>
    %10 = arith.maximumf %8, %9 : vector<128x256xf32>
    %11 = vector.extract_strided_slice %10 {offsets = [0, 0], sizes = [128, 128], strides = [1, 1]} : vector<128x256xf32> to vector<128x128xf32>
    %12 = vector.extract_strided_slice %10 {offsets = [0, 128], sizes = [128, 128], strides = [1, 1]} : vector<128x256xf32> to vector<128x128xf32>
    %13 = arith.maximumf %11, %12 : vector<128x128xf32>
    %14 = vector.extract_strided_slice %13 {offsets = [0, 0], sizes = [80, 128], strides = [1, 1]} : vector<128x128xf32> to vector<80x128xf32>
    %15 = vector.extract_strided_slice %13 {offsets = [8, 0], sizes = [80, 128], strides = [1, 1]} : vector<128x128xf32> to vector<80x128xf32>
    %16 = vector.extract_strided_slice %13 {offsets = [16, 0], sizes = [80, 128], strides = [1, 1]} : vector<128x128xf32> to vector<80x128xf32>
    %17 = vector.extract_strided_slice %13 {offsets = [24, 0], sizes = [80, 128], strides = [1, 1]} : vector<128x128xf32> to vector<80x128xf32>
    %18 = vector.extract_strided_slice %13 {offsets = [32, 0], sizes = [80, 128], strides = [1, 1]} : vector<128x128xf32> to vector<80x128xf32>
    %19 = tpu.concatenate %14, %15, %16, %17, %18 in 1 : vector<80x128xf32>, vector<80x128xf32>, vector<80x128xf32>, vector<80x128xf32>, vector<80x128xf32> -> vector<80x640xf32>
    %20 = arith.truncf %19 : vector<80x640xf32> to vector<80x640xbf16>
    %c0_6 = arith.constant 0 : index
    %c0_7 = arith.constant 0 : index
    %21 = vector.load %arg4[%c0_6, %c0_7] : memref<640x256xbf16, #tpu.memory_space<vmem>>, vector<640x256xbf16>
    %cst_8 = arith.constant dense<0.000000e+00> : vector<80x256xf32>
    %22 = tpu.matmul %20, %21, %cst_8 {dimension_numbers = #tpu.dot_dimension_numbers<[1], [0], [0], [1], [0, 0, 1, 1], [], []>} : vector<80x640xbf16>, vector<640x256xbf16>, vector<80x256xf32> -> vector<80x256xf32>
    %c0_9 = arith.constant 0 : index
    %c0_10 = arith.constant 0 : index
    %23 = vector.load %arg5[%c0_9, %c0_10] : memref<1x256xf32, #tpu.memory_space<vmem>>, vector<1x256xf32>
    %24 = vector.broadcast %23 : vector<1x256xf32> to vector<80x256xf32>
    %25 = arith.addf %22, %24 : vector<80x256xf32>
    %cst_11 = arith.constant 0.000000e+00 : f32
    %26 = vector.broadcast %cst_11 : f32 to vector<80x256xf32>
    %27 = arith.maximumf %25, %26 : vector<80x256xf32>
    %28 = vector.extract_strided_slice %27 {offsets = [0, 0], sizes = [8, 256], strides = [1, 1]} : vector<80x256xf32> to vector<8x256xf32>
    %29 = vector.extract_strided_slice %27 {offsets = [8, 0], sizes = [8, 256], strides = [1, 1]} : vector<80x256xf32> to vector<8x256xf32>
    %30 = arith.maximumf %28, %29 : vector<8x256xf32>
    %31 = vector.extract_strided_slice %30 {offsets = [0, 0], sizes = [8, 128], strides = [1, 1]} : vector<8x256xf32> to vector<8x128xf32>
    %32 = vector.extract_strided_slice %30 {offsets = [0, 128], sizes = [8, 128], strides = [1, 1]} : vector<8x256xf32> to vector<8x128xf32>
    %33 = arith.maximumf %31, %32 : vector<8x128xf32>
    %34 = vector.extract_strided_slice %27 {offsets = [16, 0], sizes = [8, 256], strides = [1, 1]} : vector<80x256xf32> to vector<8x256xf32>
    %35 = vector.extract_strided_slice %27 {offsets = [24, 0], sizes = [8, 256], strides = [1, 1]} : vector<80x256xf32> to vector<8x256xf32>
    %36 = arith.maximumf %34, %35 : vector<8x256xf32>
    %37 = vector.extract_strided_slice %36 {offsets = [0, 0], sizes = [8, 128], strides = [1, 1]} : vector<8x256xf32> to vector<8x128xf32>
    %38 = vector.extract_strided_slice %36 {offsets = [0, 128], sizes = [8, 128], strides = [1, 1]} : vector<8x256xf32> to vector<8x128xf32>
    %39 = arith.maximumf %37, %38 : vector<8x128xf32>
    %40 = vector.extract_strided_slice %27 {offsets = [32, 0], sizes = [8, 256], strides = [1, 1]} : vector<80x256xf32> to vector<8x256xf32>
    %41 = vector.extract_strided_slice %27 {offsets = [40, 0], sizes = [8, 256], strides = [1, 1]} : vector<80x256xf32> to vector<8x256xf32>
    %42 = arith.maximumf %40, %41 : vector<8x256xf32>
    %43 = vector.extract_strided_slice %42 {offsets = [0, 0], sizes = [8, 128], strides = [1, 1]} : vector<8x256xf32> to vector<8x128xf32>
    %44 = vector.extract_strided_slice %42 {offsets = [0, 128], sizes = [8, 128], strides = [1, 1]} : vector<8x256xf32> to vector<8x128xf32>
    %45 = arith.maximumf %43, %44 : vector<8x128xf32>
    %46 = vector.extract_strided_slice %27 {offsets = [48, 0], sizes = [8, 256], strides = [1, 1]} : vector<80x256xf32> to vector<8x256xf32>
    %47 = vector.extract_strided_slice %27 {offsets = [56, 0], sizes = [8, 256], strides = [1, 1]} : vector<80x256xf32> to vector<8x256xf32>
    %48 = arith.maximumf %46, %47 : vector<8x256xf32>
    %49 = vector.extract_strided_slice %48 {offsets = [0, 0], sizes = [8, 128], strides = [1, 1]} : vector<8x256xf32> to vector<8x128xf32>
    %50 = vector.extract_strided_slice %48 {offsets = [0, 128], sizes = [8, 128], strides = [1, 1]} : vector<8x256xf32> to vector<8x128xf32>
    %51 = arith.maximumf %49, %50 : vector<8x128xf32>
    %52 = vector.extract_strided_slice %27 {offsets = [64, 0], sizes = [8, 256], strides = [1, 1]} : vector<80x256xf32> to vector<8x256xf32>
    %53 = vector.extract_strided_slice %27 {offsets = [72, 0], sizes = [8, 256], strides = [1, 1]} : vector<80x256xf32> to vector<8x256xf32>
    %54 = arith.maximumf %52, %53 : vector<8x256xf32>
    %55 = vector.extract_strided_slice %54 {offsets = [0, 0], sizes = [8, 128], strides = [1, 1]} : vector<8x256xf32> to vector<8x128xf32>
    %56 = vector.extract_strided_slice %54 {offsets = [0, 128], sizes = [8, 128], strides = [1, 1]} : vector<8x256xf32> to vector<8x128xf32>
    %57 = arith.maximumf %55, %56 : vector<8x128xf32>
    %58 = tpu.concatenate %33, %39, %45, %51, %57 in 1 : vector<8x128xf32>, vector<8x128xf32>, vector<8x128xf32>, vector<8x128xf32>, vector<8x128xf32> -> vector<8x640xf32>
    %59 = arith.truncf %58 : vector<8x640xf32> to vector<8x640xbf16>
    %c0_12 = arith.constant 0 : index
    %c0_13 = arith.constant 0 : index
    %60 = vector.load %arg6[%c0_12, %c0_13] : memref<640x128xbf16, #tpu.memory_space<vmem>>, vector<640x128xbf16>
    %cst_14 = arith.constant dense<0.000000e+00> : vector<8x128xf32>
    %61 = tpu.matmul %59, %60, %cst_14 {dimension_numbers = #tpu.dot_dimension_numbers<[1], [0], [0], [1], [0, 0, 1, 1], [], []>} : vector<8x640xbf16>, vector<640x128xbf16>, vector<8x128xf32> -> vector<8x128xf32>
    %c0_15 = arith.constant 0 : index
    %c0_16 = arith.constant 0 : index
    %62 = vector.load %arg7[%c0_15, %c0_16] : memref<1x128xf32, #tpu.memory_space<vmem>>, vector<1x128xf32>
    %63 = vector.broadcast %62 : vector<1x128xf32> to vector<8x128xf32>
    %64 = arith.addf %61, %63 : vector<8x128xf32>
    %c0_17 = arith.constant 0 : index
    %c0_18 = arith.constant 0 : index
    %65 = vector.load %arg8[%c0_17, %c0_18] : memref<1x128xf32, #tpu.memory_space<vmem>>, vector<1x128xf32>
    %c0_19 = arith.constant 0 : index
    %c0_20 = arith.constant 0 : index
    %66 = vector.load %arg9[%c0_19, %c0_20] : memref<1x128xf32, #tpu.memory_space<vmem>>, vector<1x128xf32>
    %cst_21 = arith.constant dense<0.000000e+00> : vector<128xf32>
    %67 = vector.multi_reduction <add>, %64, %cst_21 [0] : vector<8x128xf32> to vector<128xf32>
    %68 = vector.shape_cast %67 : vector<128xf32> to vector<1x128xf32>
    %cst_22 = arith.constant 8.000000e+00 : f32
    %69 = vector.broadcast %cst_22 : f32 to vector<1x128xf32>
    %70 = arith.divf %68, %69 : vector<1x128xf32>
    %71 = vector.broadcast %70 : vector<1x128xf32> to vector<8x128xf32>
    %72 = arith.subf %64, %71 : vector<8x128xf32>
    %73 = vector.broadcast %70 : vector<1x128xf32> to vector<8x128xf32>
    %74 = arith.subf %64, %73 : vector<8x128xf32>
    %75 = arith.mulf %72, %74 : vector<8x128xf32>
    %cst_23 = arith.constant dense<0.000000e+00> : vector<128xf32>
    %76 = vector.multi_reduction <add>, %75, %cst_23 [0] : vector<8x128xf32> to vector<128xf32>
    %77 = vector.shape_cast %76 : vector<128xf32> to vector<1x128xf32>
    %cst_24 = arith.constant 8.000000e+00 : f32
    %78 = vector.broadcast %cst_24 : f32 to vector<1x128xf32>
    %79 = arith.divf %77, %78 : vector<1x128xf32>
    %80 = vector.broadcast %70 : vector<1x128xf32> to vector<8x128xf32>
    %81 = arith.subf %64, %80 : vector<8x128xf32>
    %cst_25 = arith.constant 9.99999974E-6 : f32
    %82 = vector.broadcast %cst_25 : f32 to vector<1x128xf32>
    %83 = arith.addf %79, %82 : vector<1x128xf32>
    %84 = math.rsqrt %83 : vector<1x128xf32>
    %85 = vector.broadcast %84 : vector<1x128xf32> to vector<8x128xf32>
    %86 = arith.mulf %81, %85 : vector<8x128xf32>
    %87 = vector.broadcast %65 : vector<1x128xf32> to vector<8x128xf32>
    %88 = arith.mulf %86, %87 : vector<8x128xf32>
    %89 = vector.broadcast %66 : vector<1x128xf32> to vector<8x128xf32>
    %90 = arith.addf %88, %89 : vector<8x128xf32>
    %cst_26 = arith.constant 0.000000e+00 : f32
    %91 = vector.broadcast %cst_26 : f32 to vector<8x128xf32>
    %92 = arith.maximumf %90, %91 : vector<8x128xf32>
    %93 = arith.truncf %92 : vector<8x128xf32> to vector<8x128xbf16>
    %c0_27 = arith.constant 0 : index
    %c0_28 = arith.constant 0 : index
    %94 = vector.load %arg10[%c0_27, %c0_28] : memref<128x128xbf16, #tpu.memory_space<vmem>>, vector<128x128xbf16>
    %cst_29 = arith.constant dense<0.000000e+00> : vector<8x128xf32>
    %95 = tpu.matmul %93, %94, %cst_29 {dimension_numbers = #tpu.dot_dimension_numbers<[1], [0], [0], [1], [0, 0, 1, 1], [], []>} : vector<8x128xbf16>, vector<128x128xbf16>, vector<8x128xf32> -> vector<8x128xf32>
    %c0_30 = arith.constant 0 : index
    %c0_31 = arith.constant 0 : index
    %96 = vector.load %arg11[%c0_30, %c0_31] : memref<1x128xf32, #tpu.memory_space<vmem>>, vector<1x128xf32>
    %97 = vector.broadcast %96 : vector<1x128xf32> to vector<8x128xf32>
    %98 = arith.addf %95, %97 : vector<8x128xf32>
    %c0_32 = arith.constant 0 : index
    %c0_33 = arith.constant 0 : index
    %99 = vector.load %arg12[%c0_32, %c0_33] : memref<1x128xf32, #tpu.memory_space<vmem>>, vector<1x128xf32>
    %c0_34 = arith.constant 0 : index
    %c0_35 = arith.constant 0 : index
    %100 = vector.load %arg13[%c0_34, %c0_35] : memref<1x128xf32, #tpu.memory_space<vmem>>, vector<1x128xf32>
    %cst_36 = arith.constant dense<0.000000e+00> : vector<128xf32>
    %101 = vector.multi_reduction <add>, %98, %cst_36 [0] : vector<8x128xf32> to vector<128xf32>
    %102 = vector.shape_cast %101 : vector<128xf32> to vector<1x128xf32>
    %cst_37 = arith.constant 8.000000e+00 : f32
    %103 = vector.broadcast %cst_37 : f32 to vector<1x128xf32>
    %104 = arith.divf %102, %103 : vector<1x128xf32>
    %105 = vector.broadcast %104 : vector<1x128xf32> to vector<8x128xf32>
    %106 = arith.subf %98, %105 : vector<8x128xf32>
    %107 = vector.broadcast %104 : vector<1x128xf32> to vector<8x128xf32>
    %108 = arith.subf %98, %107 : vector<8x128xf32>
    %109 = arith.mulf %106, %108 : vector<8x128xf32>
    %cst_38 = arith.constant dense<0.000000e+00> : vector<128xf32>
    %110 = vector.multi_reduction <add>, %109, %cst_38 [0] : vector<8x128xf32> to vector<128xf32>
    %111 = vector.shape_cast %110 : vector<128xf32> to vector<1x128xf32>
    %cst_39 = arith.constant 8.000000e+00 : f32
    %112 = vector.broadcast %cst_39 : f32 to vector<1x128xf32>
    %113 = arith.divf %111, %112 : vector<1x128xf32>
    %114 = vector.broadcast %104 : vector<1x128xf32> to vector<8x128xf32>
    %115 = arith.subf %98, %114 : vector<8x128xf32>
    %cst_40 = arith.constant 9.99999974E-6 : f32
    %116 = vector.broadcast %cst_40 : f32 to vector<1x128xf32>
    %117 = arith.addf %113, %116 : vector<1x128xf32>
    %118 = math.rsqrt %117 : vector<1x128xf32>
    %119 = vector.broadcast %118 : vector<1x128xf32> to vector<8x128xf32>
    %120 = arith.mulf %115, %119 : vector<8x128xf32>
    %121 = vector.broadcast %99 : vector<1x128xf32> to vector<8x128xf32>
    %122 = arith.mulf %120, %121 : vector<8x128xf32>
    %123 = vector.broadcast %100 : vector<1x128xf32> to vector<8x128xf32>
    %124 = arith.addf %122, %123 : vector<8x128xf32>
    %cst_41 = arith.constant 0.000000e+00 : f32
    %125 = vector.broadcast %cst_41 : f32 to vector<8x128xf32>
    %126 = arith.maximumf %124, %125 : vector<8x128xf32>
    %127 = arith.truncf %126 : vector<8x128xf32> to vector<8x128xbf16>
    %c0_42 = arith.constant 0 : index
    %c0_43 = arith.constant 0 : index
    %128 = vector.load %arg14[%c0_42, %c0_43] : memref<128x128xbf16, #tpu.memory_space<vmem>>, vector<128x128xbf16>
    %cst_44 = arith.constant dense<0.000000e+00> : vector<8x128xf32>
    %129 = tpu.matmul %127, %128, %cst_44 {dimension_numbers = #tpu.dot_dimension_numbers<[1], [0], [0], [1], [0, 0, 1, 1], [], []>} : vector<8x128xbf16>, vector<128x128xbf16>, vector<8x128xf32> -> vector<8x128xf32>
    %c0_45 = arith.constant 0 : index
    %c0_46 = arith.constant 0 : index
    %130 = vector.load %arg15[%c0_45, %c0_46] : memref<1x128xf32, #tpu.memory_space<vmem>>, vector<1x128xf32>
    %131 = vector.broadcast %130 : vector<1x128xf32> to vector<8x128xf32>
    %132 = arith.addf %129, %131 : vector<8x128xf32>
    %c0_47 = arith.constant 0 : index
    %c0_48 = arith.constant 0 : index
    %133 = vector.load %arg16[%c0_47, %c0_48] : memref<8x128xf32, #tpu.memory_space<vmem>>, vector<8x128xf32>
    tpu.vector_store %arg16[%c0_47, %c0_48], %132 {strides = array<i32>} : memref<8x128xf32, #tpu.memory_space<vmem>>, vector<8x128xf32>,
    return
  }
  func.func @transform_0(%arg0: i32) -> (i32, i32) {
    %c0_i32 = arith.constant 0 : i32
    %c0_i32_0 = arith.constant 0 : i32
    %c0_i32_1 = arith.constant 0 : i32
    return %c0_i32, %c0_i32_0 : i32, i32
  }
  func.func @transform_1(%arg0: i32) -> (i32, i32) {
    %c0_i32 = arith.constant 0 : i32
    %c0_i32_0 = arith.constant 0 : i32
    %c0_i32_1 = arith.constant 0 : i32
    return %c0_i32, %c0_i32_0 : i32, i32
  }
  func.func @transform_2(%arg0: i32) -> (i32, i32) {
    %c0_i32 = arith.constant 0 : i32
    %c0_i32_0 = arith.constant 0 : i32
    %c0_i32_1 = arith.constant 0 : i32
    return %c0_i32, %c0_i32_0 : i32, i32
  }
  func.func @transform_3(%arg0: i32) -> (i32, i32) {
    %c0_i32 = arith.constant 0 : i32
    %c0_i32_0 = arith.constant 0 : i32
    %c0_i32_1 = arith.constant 0 : i32
    return %c0_i32, %c0_i32_0 : i32, i32
  }
  func.func @transform_4(%arg0: i32) -> (i32, i32) {
    %c0_i32 = arith.constant 0 : i32
    %c0_i32_0 = arith.constant 0 : i32
    %c0_i32_1 = arith.constant 0 : i32
    return %c0_i32, %c0_i32_0 : i32, i32
  }
  func.func @transform_5(%arg0: i32) -> (i32, i32) {
    %c0_i32 = arith.constant 0 : i32
    %c0_i32_0 = arith.constant 0 : i32
    %c0_i32_1 = arith.constant 0 : i32
    return %c0_i32, %c0_i32_0 : i32, i32
  }
  func.func @transform_6(%arg0: i32) -> (i32, i32) {
    %c0_i32 = arith.constant 0 : i32
    %c0_i32_0 = arith.constant 0 : i32
    %c0_i32_1 = arith.constant 0 : i32
    return %c0_i32, %c0_i32_0 : i32, i32
  }
  func.func @transform_7(%arg0: i32) -> (i32, i32) {
    %c0_i32 = arith.constant 0 : i32
    %c0_i32_0 = arith.constant 0 : i32
    %c0_i32_1 = arith.constant 0 : i32
    return %c0_i32, %c0_i32_0 : i32, i32
  }
  func.func @transform_8(%arg0: i32) -> (i32, i32) {
    %c0_i32 = arith.constant 0 : i32
    %c0_i32_0 = arith.constant 0 : i32
    %c0_i32_1 = arith.constant 0 : i32
    return %c0_i32, %c0_i32_0 : i32, i32
  }
  func.func @transform_9(%arg0: i32) -> (i32, i32) {
    %c0_i32 = arith.constant 0 : i32
    %c0_i32_0 = arith.constant 0 : i32
    %c0_i32_1 = arith.constant 0 : i32
    return %c0_i32, %c0_i32_0 : i32, i32
  }
  func.func @transform_10(%arg0: i32) -> (i32, i32) {
    %c0_i32 = arith.constant 0 : i32
    %c0_i32_0 = arith.constant 0 : i32
    %c0_i32_1 = arith.constant 0 : i32
    return %c0_i32, %c0_i32_0 : i32, i32
  }
  func.func @transform_11(%arg0: i32) -> (i32, i32) {
    %c0_i32 = arith.constant 0 : i32
    %c0_i32_0 = arith.constant 0 : i32
    %c0_i32_1 = arith.constant 0 : i32
    return %c0_i32, %c0_i32_0 : i32, i32
  }
  func.func @transform_12(%arg0: i32) -> (i32, i32) {
    %c0_i32 = arith.constant 0 : i32
    %c0_i32_0 = arith.constant 0 : i32
    %c0_i32_1 = arith.constant 0 : i32
    return %c0_i32, %c0_i32_0 : i32, i32
  }
  func.func @transform_13(%arg0: i32) -> (i32, i32) {
    %c0_i32 = arith.constant 0 : i32
    %c0_i32_0 = arith.constant 0 : i32
    %c0_i32_1 = arith.constant 0 : i32
    return %c0_i32, %c0_i32_0 : i32, i32
  }
  func.func @transform_14(%arg0: i32) -> (i32, i32) {
    %c0_i32 = arith.constant 0 : i32
    %c0_i32_0 = arith.constant 0 : i32
    %c0_i32_1 = arith.constant 0 : i32
    return %c0_i32, %c0_i32_0 : i32, i32
  }
  func.func @transform_15(%arg0: i32) -> (i32, i32) {
    %c0_i32 = arith.constant 0 : i32
    %c0_i32_0 = arith.constant 0 : i32
    %c0_i32_1 = arith.constant 0 : i32
    return %c0_i32, %c0_i32_0 : i32, i32
  }
}

</mosaic_0001>

<llo_original>
// kernel: lenet_forward.1
$region0: #{lenet_forward.1}
  #allocation0 [shape = 'u32[]', space=smem, size = 0x4, offset = 0x4, fixed_abs, tag = 'smem constant byte address 0x4 - core index']
  #allocation1 [shape = 'u32[144,128]{1,0:T(1,128)}', space=vmem, size = 0x12000, scoped, tag = 'internal scratch']
  %s0 = inlined_call_operand.vmem [shape: bf16[256,128], index: 0, kind: input, shape index: {}]
  %s1 = inlined_call_operand.vmem [shape: bf16[128,256], index: 1, kind: input, shape index: {}]
  %s2 = inlined_call_operand.vmem [shape: f32[1,256], index: 2, kind: input, shape index: {}]
  %s3 = inlined_call_operand.vmem [shape: bf16[640,256], index: 3, kind: input, shape index: {}]
  %s4 = inlined_call_operand.vmem [shape: f32[1,256], index: 4, kind: input, shape index: {}]
  %s5 = inlined_call_operand.vmem [shape: bf16[640,128], index: 5, kind: input, shape index: {}]
  %s6 = inlined_call_operand.vmem [shape: f32[1,128], index: 6, kind: input, shape index: {}]
  %s7 = inlined_call_operand.vmem [shape: f32[1,128], index: 7, kind: input, shape index: {}]
  %s8 = inlined_call_operand.vmem [shape: f32[1,128], index: 8, kind: input, shape index: {}]
  %s9 = inlined_call_operand.vmem [shape: bf16[128,128], index: 9, kind: input, shape index: {}]
  %s10 = inlined_call_operand.vmem [shape: f32[1,128], index: 10, kind: input, shape index: {}]
  %s11 = inlined_call_operand.vmem [shape: f32[1,128], index: 11, kind: input, shape index: {}]
  %s12 = inlined_call_operand.vmem [shape: f32[1,128], index: 12, kind: input, shape index: {}]
  %s13 = inlined_call_operand.vmem [shape: bf16[128,128], index: 13, kind: input, shape index: {}]
  %s14 = inlined_call_operand.vmem [shape: f32[1,128], index: 14, kind: input, shape index: {}]
  %s15 = inlined_call_operand.hbm [shape: f32[8,128], index: 15, kind: output, shape index: {}]
  %s16 = sld [smem:[#allocation0]]
  $region70: #{lenet_forward.1} parent=0
    _
  %s18 = ssub.s32 1, %s16
  %s19 = scalar_select 0, %s18, %s16
  $region1: #{lenet_forward.1} parent=0
    #allocation2 [shape = 'u8[4096]{0}', space=vmem, size = 0x1000, scoped, tag = 'output window, operand 0, single buffered']
    #allocation3 [shape = 's32[1]{0}', space=sflag, size = 0x4, scoped, tag = 'scoped memory for lenet_forward.1']
    %20 = vsyncpa [#allocation3], 0
    // Predicated region
    $region2: #{lenet_forward.1} parent=1 // pred_check
      _
    $region3: #{lenet_forward.1} parent=1 // pred_check_branch
      %22 = sbr.rel (0) target = $region5
    $region4: #{lenet_forward.1} parent=1 // pred_region
      _
    $region5: #{lenet_forward.1} parent=1 // pred_fallthru
      _
    // Predicated region
    $region6: #{lenet_forward.1} parent=1 // pred_check
      _
    $region7: #{lenet_forward.1} parent=1 // pred_check_branch
      %24 = sbr.rel (0) target = $region9
    $region8: #{lenet_forward.1} parent=1 // pred_region
      _
    $region9: #{lenet_forward.1} parent=1 // pred_fallthru
      _
    // Predicated region
    $region10: #{lenet_forward.1} parent=1 // pred_check
      _
    $region11: #{lenet_forward.1} parent=1 // pred_check_branch
      %26 = sbr.rel (0) target = $region13
    $region12: #{lenet_forward.1} parent=1 // pred_region
      _
    $region13: #{lenet_forward.1} parent=1 // pred_fallthru
      _
    // Predicated region
    $region14: #{lenet_forward.1} parent=1 // pred_check
      _
    $region15: #{lenet_forward.1} parent=1 // pred_check_branch
      %28 = sbr.rel (0) target = $region17
    $region16: #{lenet_forward.1} parent=1 // pred_region
      _
    $region17: #{lenet_forward.1} parent=1 // pred_fallthru
      _
    // Predicated region
    $region18: #{lenet_forward.1} parent=1 // pred_check
      _
    $region19: #{lenet_forward.1} parent=1 // pred_check_branch
      %30 = sbr.rel (0) target = $region21
    $region20: #{lenet_forward.1} parent=1 // pred_region
      _
    $region21: #{lenet_forward.1} parent=1 // pred_fallthru
      _
    // Predicated region
    $region22: #{lenet_forward.1} parent=1 // pred_check
      _
    $region23: #{lenet_forward.1} parent=1 // pred_check_branch
      %32 = sbr.rel (0) target = $region25
    $region24: #{lenet_forward.1} parent=1 // pred_region
      _
    $region25: #{lenet_forward.1} parent=1 // pred_fallthru
      _
    // Predicated region
    $region26: #{lenet_forward.1} parent=1 // pred_check
      _
    $region27: #{lenet_forward.1} parent=1 // pred_check_branch
      %34 = sbr.rel (0) target = $region29
    $region28: #{lenet_forward.1} parent=1 // pred_region
      _
    $region29: #{lenet_forward.1} parent=1 // pred_fallthru
      _
    // Predicated region
    $region30: #{lenet_forward.1} parent=1 // pred_check
      _
    $region31: #{lenet_forward.1} parent=1 // pred_check_branch
      %36 = sbr.rel (0) target = $region33
    $region32: #{lenet_forward.1} parent=1 // pred_region
      _
    $region33: #{lenet_forward.1} parent=1 // pred_fallthru
      _
    // Predicated region
    $region34: #{lenet_forward.1} parent=1 // pred_check
      _
    $region35: #{lenet_forward.1} parent=1 // pred_check_branch
      %38 = sbr.rel (0) target = $region37
    $region36: #{lenet_forward.1} parent=1 // pred_region
      _
    $region37: #{lenet_forward.1} parent=1 // pred_fallthru
      _
    // Predicated region
    $region38: #{lenet_forward.1} parent=1 // pred_check
      _
    $region39: #{lenet_forward.1} parent=1 // pred_check_branch
      %40 = sbr.rel (0) target = $region41
    $region40: #{lenet_forward.1} parent=1 // pred_region
      _
    $region41: #{lenet_forward.1} parent=1 // pred_fallthru
      _
    // Predicated region
    $region42: #{lenet_forward.1} parent=1 // pred_check
      _
    $region43: #{lenet_forward.1} parent=1 // pred_check_branch
      %42 = sbr.rel (0) target = $region45
    $region44: #{lenet_forward.1} parent=1 // pred_region
      _
    $region45: #{lenet_forward.1} parent=1 // pred_fallthru
      _
    // Predicated region
    $region46: #{lenet_forward.1} parent=1 // pred_check
      _
    $region47: #{lenet_forward.1} parent=1 // pred_check_branch
      %44 = sbr.rel (0) target = $region49
    $region48: #{lenet_forward.1} parent=1 // pred_region
      _
    $region49: #{lenet_forward.1} parent=1 // pred_fallthru
      _
    // Predicated region
    $region50: #{lenet_forward.1} parent=1 // pred_check
      _
    $region51: #{lenet_forward.1} parent=1 // pred_check_branch
      %46 = sbr.rel (0) target = $region53
    $region52: #{lenet_forward.1} parent=1 // pred_region
      _
    $region53: #{lenet_forward.1} parent=1 // pred_fallthru
      _
    // Predicated region
    $region54: #{lenet_forward.1} parent=1 // pred_check
      _
    $region55: #{lenet_forward.1} parent=1 // pred_check_branch
      %48 = sbr.rel (0) target = $region57
    $region56: #{lenet_forward.1} parent=1 // pred_region
      _
    $region57: #{lenet_forward.1} parent=1 // pred_fallthru
      _
    // Predicated region
    $region58: #{lenet_forward.1} parent=1 // pred_check
      _
    $region59: #{lenet_forward.1} parent=1 // pred_check_branch
      %50 = sbr.rel (0) target = $region61
    $region60: #{lenet_forward.1} parent=1 // pred_region
      _
    $region61: #{lenet_forward.1} parent=1 // pred_fallthru
      _
    %v52 = vld [vmem:[%s0] sm:$0xf]
    %v53 = vld [vmem:[%s0 + $0x4] sm:$0xf]
    %v54 = vld [vmem:[%s0 + $0x8] sm:$0xf]
    %v55 = vld [vmem:[%s0 + $0xc] sm:$0xf]
    %v56 = vld [vmem:[%s0 + $0x10] sm:$0xf]
    %v57 = vld [vmem:[%s0 + $0x14] sm:$0xf]
    %v58 = vld [vmem:[%s0 + $0x18] sm:$0xf]
    %v59 = vld [vmem:[%s0 + $0x1c] sm:$0xf]
    %v60 = vld [vmem:[%s0 + $0x20] sm:$0xf]
    %v61 = vld [vmem:[%s0 + $0x24] sm:$0xf]
    %v62 = vld [vmem:[%s0 + $0x28] sm:$0xf]
    %v63 = vld [vmem:[%s0 + $0x2c] sm:$0xf]
    %v64 = vld [vmem:[%s0 + $0x30] sm:$0xf]
    %v65 = vld [vmem:[%s0 + $0x34] sm:$0xf]
    %v66 = vld [vmem:[%s0 + $0x38] sm:$0xf]
    %v67 = vld [vmem:[%s0 + $0x3c] sm:$0xf]
    %v68 = vld [vmem:[%s0 + $0x40] sm:$0xf]
    %v69 = vld [vmem:[%s0 + $0x44] sm:$0xf]
    %v70 = vld [vmem:[%s0 + $0x48] sm:$0xf]
    %v71 = vld [vmem:[%s0 + $0x4c] sm:$0xf]
    %v72 = vld [vmem:[%s0 + $0x50] sm:$0xf]
    %v73 = vld [vmem:[%s0 + $0x54] sm:$0xf]
    %v74 = vld [vmem:[%s0 + $0x58] sm:$0xf]
    %v75 = vld [vmem:[%s0 + $0x5c] sm:$0xf]
    %v76 = vld [vmem:[%s0 + $0x60] sm:$0xf]
    %v77 = vld [vmem:[%s0 + $0x64] sm:$0xf]
    %v78 = vld [vmem:[%s0 + $0x68] sm:$0xf]
    %v79 = vld [vmem:[%s0 + $0x6c] sm:$0xf]
    %v80 = vld [vmem:[%s0 + $0x70] sm:$0xf]
    %v81 = vld [vmem:[%s0 + $0x74] sm:$0xf]
    %v82 = vld [vmem:[%s0 + $0x78] sm:$0xf]
    %v83 = vld [vmem:[%s0 + $0x7c] sm:$0xf]
    %v84 = vld [vmem:[%s1] sm:$0xff]
    %v85 = vld [vmem:[%s1 + $0x8] sm:$0xff]
    %v86 = vld [vmem:[%s1 + $0x10] sm:$0xff]
    %v87 = vld [vmem:[%s1 + $0x18] sm:$0xff]
    %v88 = vld [vmem:[%s1 + $0x20] sm:$0xff]
    %v89 = vld [vmem:[%s1 + $0x28] sm:$0xff]
    %v90 = vld [vmem:[%s1 + $0x30] sm:$0xff]
    %v91 = vld [vmem:[%s1 + $0x38] sm:$0xff]
    %v92 = vld [vmem:[%s1 + $0x40] sm:$0xff]
    %v93 = vld [vmem:[%s1 + $0x48] sm:$0xff]
    %v94 = vld [vmem:[%s1 + $0x50] sm:$0xff]
    %v95 = vld [vmem:[%s1 + $0x58] sm:$0xff]
    %v96 = vld [vmem:[%s1 + $0x60] sm:$0xff]
    %v97 = vld [vmem:[%s1 + $0x68] sm:$0xff]
    %v98 = vld [vmem:[%s1 + $0x70] sm:$0xff]
    %v99 = vld [vmem:[%s1 + $0x78] sm:$0xff]
    %v100 = vld [vmem:[%s2] sm:$0x3]
    %v102 = vlaneseq
    %v103 = vshrl.u32 %v102, 7
    %v104 = vsub.s32 0, %v103
    %v105 = vrot.slane %v100, %v104
    %v106 = vlaneseq
    %v107 = vshrl.u32 %v106, 7
    %v108 = vsub.s32 1, %v107
    %v109 = vrot.slane %v100, %v108
    %v144 = vunpack.c.l.b16 %v52
    %v145 = vunpack.c.l.b16 %v53
    %v146 = vunpack.c.l.b16 %v54
    %v147 = vunpack.c.l.b16 %v55
    %v148 = vunpack.c.l.b16 %v56
    %v149 = vunpack.c.l.b16 %v57
    %v150 = vunpack.c.l.b16 %v58
    %v151 = vunpack.c.l.b16 %v59
    %v152 = vunpack.c.l.b16 %v60
    %v153 = vunpack.c.l.b16 %v61
    %v154 = vunpack.c.l.b16 %v62
    %v155 = vunpack.c.l.b16 %v63
    %v156 = vunpack.c.l.b16 %v64
    %v157 = vunpack.c.l.b16 %v65
    %v158 = vunpack.c.l.b16 %v66
    %v159 = vunpack.c.l.b16 %v67
    %v160 = vunpack.c.l.b16 %v68
    %v161 = vunpack.c.l.b16 %v69
    %v162 = vunpack.c.l.b16 %v70
    %v163 = vunpack.c.l.b16 %v71
    %v164 = vunpack.c.l.b16 %v72
    %v165 = vunpack.c.l.b16 %v73
    %v166 = vunpack.c.l.b16 %v74
    %v167 = vunpack.c.l.b16 %v75
    %v168 = vunpack.c.l.b16 %v76
    %v169 = vunpack.c.l.b16 %v77
    %v170 = vunpack.c.l.b16 %v78
    %v171 = vunpack.c.l.b16 %v79
    %v172 = vunpack.c.l.b16 %v80
    %v173 = vunpack.c.l.b16 %v81
    %v174 = vunpack.c.l.b16 %v82
    %v175 = vunpack.c.l.b16 %v83
    %v176 = vpack.c.b16 %v145, %v144
    %v177 = vpack.c.b16 %v147, %v146
    %v178 = vpack.c.b16 %v149, %v148
    %v179 = vpack.c.b16 %v151, %v150
    %v180 = vpack.c.b16 %v153, %v152
    %v181 = vpack.c.b16 %v155, %v154
    %v182 = vpack.c.b16 %v157, %v156
    %v183 = vpack.c.b16 %v159, %v158
    %v184 = vpack.c.b16 %v161, %v160
    %v185 = vpack.c.b16 %v163, %v162
    %v186 = vpack.c.b16 %v165, %v164
    %v187 = vpack.c.b16 %v167, %v166
    %v188 = vpack.c.b16 %v169, %v168
    %v189 = vpack.c.b16 %v171, %v170
    %v190 = vpack.c.b16 %v173, %v172
    %v191 = vpack.c.b16 %v175, %v174
    %v224 = vunpack.c.l.b16 %v84
    %v225 = vunpack.c.h.b16 %v84
    %v226 = vunpack.c.l.b16 %v85
    %v227 = vunpack.c.h.b16 %v85
    %v228 = vunpack.c.l.b16 %v86
    %v229 = vunpack.c.h.b16 %v86
    %v230 = vunpack.c.l.b16 %v87
    %v231 = vunpack.c.h.b16 %v87
    %v232 = vunpack.c.l.b16 %v88
    %v233 = vunpack.c.h.b16 %v88
    %v234 = vunpack.c.l.b16 %v89
    %v235 = vunpack.c.h.b16 %v89
    %v236 = vunpack.c.l.b16 %v90
    %v237 = vunpack.c.h.b16 %v90
    %v238 = vunpack.c.l.b16 %v91
    %v239 = vunpack.c.h.b16 %v91
    %v240 = vunpack.c.l.b16 %v92
    %v241 = vunpack.c.h.b16 %v92
    %v242 = vunpack.c.l.b16 %v93
    %v243 = vunpack.c.h.b16 %v93
    %v244 = vunpack.c.l.b16 %v94
    %v245 = vunpack.c.h.b16 %v94
    %v246 = vunpack.c.l.b16 %v95
    %v247 = vunpack.c.h.b16 %v95
    %v248 = vunpack.c.l.b16 %v96
    %v249 = vunpack.c.h.b16 %v96
    %v250 = vunpack.c.l.b16 %v97
    %v251 = vunpack.c.h.b16 %v97
    %v252 = vunpack.c.l.b16 %v98
    %v253 = vunpack.c.h.b16 %v98
    %v254 = vunpack.c.l.b16 %v99
    %v255 = vunpack.c.h.b16 %v99
    %v256 = vpack.c.b16 %v226, %v224
    %v257 = vpack.c.b16 %v227, %v225
    %v258 = vpack.c.b16 %v230, %v228
    %v259 = vpack.c.b16 %v231, %v229
    %v260 = vpack.c.b16 %v234, %v232
    %v261 = vpack.c.b16 %v235, %v233
    %v262 = vpack.c.b16 %v238, %v236
    %v263 = vpack.c.b16 %v239, %v237
    %v264 = vpack.c.b16 %v242, %v240
    %v265 = vpack.c.b16 %v243, %v241
    %v266 = vpack.c.b16 %v246, %v244
    %v267 = vpack.c.b16 %v247, %v245
    %v268 = vpack.c.b16 %v250, %v248
    %v269 = vpack.c.b16 %v251, %v249
    %v270 = vpack.c.b16 %v254, %v252
    %v271 = vpack.c.b16 %v255, %v253
    %288 = vmatprep.subr.bf16.mxu0 %v271
    %289 = vmatpush1.bf16.msra.mxu0 %v270
    %290 = vmatprep.subr.bf16.mxu0 %v269
    %291 = vmatpush1.bf16.msra.mxu0 %v268
    %292 = vmatprep.subr.bf16.mxu0 %v267
    %293 = vmatpush1.bf16.msra.mxu0 %v266
    %294 = vmatprep.subr.bf16.mxu0 %v265
    %295 = vmatpush1.bf16.msra.mxu0 %v264
    %296 = vmatprep.subr.bf16.mxu0 %v263
    %297 = vmatpush1.bf16.msra.mxu0 %v262
    %298 = vmatprep.subr.bf16.mxu0 %v261
    %299 = vmatpush1.bf16.msra.mxu0 %v260
    %300 = vmatprep.subr.bf16.mxu0 %v259
    %301 = vmatpush1.bf16.msra.mxu0 %v258
    %302 = vmatprep.subr.bf16.mxu0 %v257
    %303 = vmatpush1.bf16.msra.mxu0 %v256
    %304 = vmatprep.subr.bf16.mxu0 0
    %305 = vmatpush2.bf16.msra.mxu0 0
    %306 = vmatprep.subr.bf16.mxu0 0
    %307 = vmatpush2.bf16.msra.mxu0 0
    %308 = vmatprep.subr.bf16.mxu0 0
    %309 = vmatpush2.bf16.msra.mxu0 0
    %310 = vmatprep.subr.bf16.mxu0 0
    %311 = vmatpush2.bf16.msra.mxu0 0
    %312 = vmatprep.subr.bf16.mxu0 0
    %313 = vmatpush2.bf16.msra.mxu0 0
    %314 = vmatprep.subr.bf16.mxu0 0
    %315 = vmatpush2.bf16.msra.mxu0 0
    %316 = vmatprep.subr.bf16.mxu0 0
    %317 = vmatpush2.bf16.msra.mxu0 0
    %318 = vmatprep.subr.bf16.mxu0 0
    %319 = vmatpush2.bf16.msra.mxu0 0
    %320 = vmatprep.mubr.bf16.mxu0 0
    %321 = vmatmul.mubr.bf16.gmra.mxu0 %v176
    %v322 = vpop.f32.mrf.mxu0
    %v323 = vadd.f32 %v105, %v322
    %v324 = vpop.f32.mrf.mxu0
    %v325 = vadd.f32 %v109, %v324
    %v326 = vpop.f32.mrf.mxu0
    %v327 = vadd.f32 %v105, %v326
    %v328 = vpop.f32.mrf.mxu0
    %v329 = vadd.f32 %v109, %v328
    %330 = vmatprep.mubr.bf16.mxu0 0
    %331 = vmatmul.mubr.bf16.gmra.mxu0 %v177
    %v332 = vpop.f32.mrf.mxu0
    %v333 = vadd.f32 %v105, %v332
    %v334 = vpop.f32.mrf.mxu0
    %v335 = vadd.f32 %v109, %v334
    %v336 = vpop.f32.mrf.mxu0
    %v337 = vadd.f32 %v105, %v336
    %v338 = vpop.f32.mrf.mxu0
    %v339 = vadd.f32 %v109, %v338
    %340 = vmatprep.mubr.bf16.mxu0 0
    %341 = vmatmul.mubr.bf16.gmra.mxu0 %v178
    %v342 = vpop.f32.mrf.mxu0
    %v343 = vadd.f32 %v105, %v342
    %v344 = vpop.f32.mrf.mxu0
    %v345 = vadd.f32 %v109, %v344
    %v346 = vpop.f32.mrf.mxu0
    %v347 = vadd.f32 %v105, %v346
    %v348 = vpop.f32.mrf.mxu0
    %v349 = vadd.f32 %v109, %v348
    %350 = vmatprep.mubr.bf16.mxu0 0
    %351 = vmatmul.mubr.bf16.gmra.mxu0 %v179
    %v352 = vpop.f32.mrf.mxu0
    %v353 = vadd.f32 %v105, %v352
    %v354 = vpop.f32.mrf.mxu0
    %v355 = vadd.f32 %v109, %v354
    %v356 = vpop.f32.mrf.mxu0
    %v357 = vadd.f32 %v105, %v356
    %v358 = vpop.f32.mrf.mxu0
    %v359 = vadd.f32 %v109, %v358
    %360 = vmatprep.mubr.bf16.mxu0 0
    %361 = vmatmul.mubr.bf16.gmra.mxu0 %v180
    %v362 = vpop.f32.mrf.mxu0
    %v363 = vadd.f32 %v105, %v362
    %v364 = vpop.f32.mrf.mxu0
    %v365 = vadd.f32 %v109, %v364
    %v366 = vpop.f32.mrf.mxu0
    %v367 = vadd.f32 %v105, %v366
    %v368 = vpop.f32.mrf.mxu0
    %v369 = vadd.f32 %v109, %v368
    %370 = vmatprep.mubr.bf16.mxu0 0
    %371 = vmatmul.mubr.bf16.gmra.mxu0 %v181
    %v372 = vpop.f32.mrf.mxu0
    %v373 = vadd.f32 %v105, %v372
    %v374 = vpop.f32.mrf.mxu0
    %v375 = vadd.f32 %v109, %v374
    %v376 = vpop.f32.mrf.mxu0
    %v377 = vadd.f32 %v105, %v376
    %v378 = vpop.f32.mrf.mxu0
    %v379 = vadd.f32 %v109, %v378
    %380 = vmatprep.mubr.bf16.mxu0 0
    %381 = vmatmul.mubr.bf16.gmra.mxu0 %v182
    %v382 = vpop.f32.mrf.mxu0
    %v383 = vadd.f32 %v105, %v382
    %v384 = vpop.f32.mrf.mxu0
    %v385 = vadd.f32 %v109, %v384
    %v386 = vpop.f32.mrf.mxu0
    %v387 = vadd.f32 %v105, %v386
    %v388 = vpop.f32.mrf.mxu0
    %v389 = vadd.f32 %v109, %v388
    %390 = vmatprep.mubr.bf16.mxu0 0
    %391 = vmatmul.mubr.bf16.gmra.mxu0 %v183
    %v392 = vpop.f32.mrf.mxu0
    %v393 = vpop.f32.mrf.mxu0
    %v394 = vpop.f32.mrf.mxu0
    %v395 = vpop.f32.mrf.mxu0
    %396 = vmatprep.mubr.bf16.mxu0 0
    %397 = vmatmul.mubr.bf16.gmra.mxu0 %v184
    %v398 = vpop.f32.mrf.mxu0
    %v399 = vadd.f32 %v105, %v398
    %v400 = vpop.f32.mrf.mxu0
    %v401 = vadd.f32 %v109, %v400
    %v402 = vpop.f32.mrf.mxu0
    %v403 = vadd.f32 %v105, %v402
    %v404 = vpop.f32.mrf.mxu0
    %v405 = vadd.f32 %v109, %v404
    %406 = vmatprep.mubr.bf16.mxu0 0
    %407 = vmatmul.mubr.bf16.gmra.mxu0 %v185
    %v408 = vpop.f32.mrf.mxu0
    %v409 = vadd.f32 %v105, %v408
    %v410 = vpop.f32.mrf.mxu0
    %v411 = vadd.f32 %v109, %v410
    %v412 = vpop.f32.mrf.mxu0
    %v413 = vadd.f32 %v105, %v412
    %v414 = vpop.f32.mrf.mxu0
    %v415 = vadd.f32 %v109, %v414
    %416 = vmatprep.mubr.bf16.mxu0 0
    %417 = vmatmul.mubr.bf16.gmra.mxu0 %v186
    %v418 = vpop.f32.mrf.mxu0
    %v419 = vadd.f32 %v105, %v418
    %v420 = vpop.f32.mrf.mxu0
    %v421 = vadd.f32 %v109, %v420
    %v422 = vpop.f32.mrf.mxu0
    %v423 = vadd.f32 %v105, %v422
    %v424 = vpop.f32.mrf.mxu0
    %v425 = vadd.f32 %v109, %v424
    %426 = vmatprep.mubr.bf16.mxu0 0
    %427 = vmatmul.mubr.bf16.gmra.mxu0 %v187
    %v428 = vpop.f32.mrf.mxu0
    %v429 = vadd.f32 %v105, %v428
    %v430 = vpop.f32.mrf.mxu0
    %v431 = vadd.f32 %v109, %v430
    %v432 = vpop.f32.mrf.mxu0
    %v433 = vadd.f32 %v105, %v432
    %v434 = vpop.f32.mrf.mxu0
    %v435 = vadd.f32 %v109, %v434
    %436 = vmatprep.mubr.bf16.mxu0 0
    %437 = vmatmul.mubr.bf16.gmra.mxu0 %v188
    %v438 = vpop.f32.mrf.mxu0
    %v439 = vadd.f32 %v105, %v438
    %v440 = vpop.f32.mrf.mxu0
    %v441 = vadd.f32 %v109, %v440
    %v442 = vpop.f32.mrf.mxu0
    %v443 = vadd.f32 %v105, %v442
    %v444 = vpop.f32.mrf.mxu0
    %v445 = vadd.f32 %v109, %v444
    %446 = vmatprep.mubr.bf16.mxu0 0
    %447 = vmatmul.mubr.bf16.gmra.mxu0 %v189
    %v448 = vpop.f32.mrf.mxu0
    %v449 = vadd.f32 %v105, %v448
    %v450 = vpop.f32.mrf.mxu0
    %v451 = vadd.f32 %v109, %v450
    %v452 = vpop.f32.mrf.mxu0
    %v453 = vadd.f32 %v105, %v452
    %v454 = vpop.f32.mrf.mxu0
    %v455 = vadd.f32 %v109, %v454
    %456 = vmatprep.mubr.bf16.mxu0 0
    %457 = vmatmul.mubr.bf16.gmra.mxu0 %v190
    %v458 = vpop.f32.mrf.mxu0
    %v459 = vadd.f32 %v105, %v458
    %v460 = vpop.f32.mrf.mxu0
    %v461 = vadd.f32 %v109, %v460
    %v462 = vpop.f32.mrf.mxu0
    %v463 = vadd.f32 %v105, %v462
    %v464 = vpop.f32.mrf.mxu0
    %v465 = vadd.f32 %v109, %v464
    %466 = vmatprep.mubr.bf16.mxu0 0
    %467 = vmatmul.mubr.bf16.gmra.mxu0 %v191
    %v468 = vpop.f32.mrf.mxu0
    %v469 = vpop.f32.mrf.mxu0
    %v470 = vpop.f32.mrf.mxu0
    %v471 = vpop.f32.mrf.mxu0
    %472 = vdwg.mxu0
    %v473 = vmax.f32 %v323, 0.0
    %v474 = vmax.f32 %v325, 0.0
    %v475 = vmax.f32 %v327, 0.0
    %v476 = vmax.f32 %v329, 0.0
    %v477 = vmax.f32 %v333, 0.0
    %v478 = vmax.f32 %v335, 0.0
    %v479 = vmax.f32 %v337, 0.0
    %v480 = vmax.f32 %v339, 0.0
    %v481 = vmax.f32 %v343, 0.0
    %v482 = vmax.f32 %v345, 0.0
    %v483 = vmax.f32 %v347, 0.0
    %v484 = vmax.f32 %v349, 0.0
    %v485 = vmax.f32 %v353, 0.0
    %v486 = vmax.f32 %v355, 0.0
    %v487 = vmax.f32 %v357, 0.0
    %v488 = vmax.f32 %v359, 0.0
    %v489 = vmax.f32 %v363, 0.0
    %v490 = vmax.f32 %v365, 0.0
    %v491 = vmax.f32 %v367, 0.0
    %v492 = vmax.f32 %v369, 0.0
    %v493 = vmax.f32 %v373, 0.0
    %v494 = vmax.f32 %v375, 0.0
    %v495 = vmax.f32 %v377, 0.0
    %v496 = vmax.f32 %v379, 0.0
    %v497 = vmax.f32 %v383, 0.0
    %v498 = vmax.f32 %v385, 0.0
    %v499 = vmax.f32 %v387, 0.0
    %v500 = vmax.f32 %v389, 0.0
    %v501 = vmax.f32 %v399, 0.0
    %v502 = vmax.f32 %v401, 0.0
    %v503 = vmax.f32 %v403, 0.0
    %v504 = vmax.f32 %v405, 0.0
    %v505 = vmax.f32 %v409, 0.0
    %v506 = vmax.f32 %v411, 0.0
    %v507 = vmax.f32 %v413, 0.0
    %v508 = vmax.f32 %v415, 0.0
    %v509 = vmax.f32 %v419, 0.0
    %v510 = vmax.f32 %v421, 0.0
    %v511 = vmax.f32 %v423, 0.0
    %v512 = vmax.f32 %v425, 0.0
    %v513 = vmax.f32 %v429, 0.0
    %v514 = vmax.f32 %v431, 0.0
    %v515 = vmax.f32 %v433, 0.0
    %v516 = vmax.f32 %v435, 0.0
    %v517 = vmax.f32 %v439, 0.0
    %v518 = vmax.f32 %v441, 0.0
    %v519 = vmax.f32 %v443, 0.0
    %v520 = vmax.f32 %v445, 0.0
    %v521 = vmax.f32 %v449, 0.0
    %v522 = vmax.f32 %v451, 0.0
    %v523 = vmax.f32 %v453, 0.0
    %v524 = vmax.f32 %v455, 0.0
    %v525 = vmax.f32 %v459, 0.0
    %v526 = vmax.f32 %v461, 0.0
    %v527 = vmax.f32 %v463, 0.0
    %v528 = vmax.f32 %v465, 0.0
    %v529 = vmax.f32 %v473, %v501
    %v530 = vmax.f32 %v474, %v502
    %v531 = vmax.f32 %v475, %v503
    %v532 = vmax.f32 %v476, %v504
    %v533 = vmax.f32 %v477, %v505
    %v534 = vmax.f32 %v478, %v506
    %v535 = vmax.f32 %v479, %v507
    %v536 = vmax.f32 %v480, %v508
    %v537 = vmax.f32 %v481, %v509
    %v538 = vmax.f32 %v482, %v510
    %v539 = vmax.f32 %v483, %v511
    %v540 = vmax.f32 %v484, %v512
    %v541 = vmax.f32 %v485, %v513
    %v542 = vmax.f32 %v486, %v514
    %v543 = vmax.f32 %v487, %v515
    %v544 = vmax.f32 %v488, %v516
    %v545 = vmax.f32 %v489, %v517
    %v546 = vmax.f32 %v490, %v518
    %v547 = vmax.f32 %v491, %v519
    %v548 = vmax.f32 %v492, %v520
    %v549 = vmax.f32 %v493, %v521
    %v550 = vmax.f32 %v494, %v522
    %v551 = vmax.f32 %v495, %v523
    %v552 = vmax.f32 %v496, %v524
    %v553 = vmax.f32 %v497, %v525
    %v554 = vmax.f32 %v498, %v526
    %v555 = vmax.f32 %v499, %v527
    %v556 = vmax.f32 %v500, %v528
    %v557 = vmax.f32 %v529, %v530
    %v558 = vmax.f32 %v531, %v532
    %v559 = vmax.f32 %v533, %v534
    %v560 = vmax.f32 %v535, %v536
    %v561 = vmax.f32 %v537, %v538
    %v562 = vmax.f32 %v539, %v540
    %v563 = vmax.f32 %v541, %v542
    %v564 = vmax.f32 %v543, %v544
    %v565 = vmax.f32 %v545, %v546
    %v566 = vmax.f32 %v547, %v548
    %v567 = vmax.f32 %v549, %v550
    %v568 = vmax.f32 %v551, %v552
    %v569 = vmax.f32 %v553, %v554
    %v570 = vmax.f32 %v555, %v556
    %v571 = vpack.c.bf16 %v558, %v557
    %v572 = vpack.c.bf16 %v559, %v558
    %v573 = vpack.c.bf16 %v560, %v559
    %v574 = vpack.c.bf16 %v561, %v560
    %v575 = vpack.c.bf16 %v562, %v561
    %v576 = vpack.c.bf16 %v563, %v562
    %v577 = vpack.c.bf16 %v564, %v563
    %v578 = vpack.c.bf16 %v565, %v564
    %v579 = vpack.c.bf16 %v566, %v565
    %v580 = vpack.c.bf16 %v567, %v566
    %v581 = vpack.c.bf16 %v568, %v567
    %v582 = vpack.c.bf16 %v569, %v568
    %v583 = vpack.c.bf16 %v570, %v569
    %v584 = vld [vmem:[%s3] sm:$0xff]
    %v585 = vld [vmem:[%s3 + $0x8] sm:$0xff]
    %v586 = vld [vmem:[%s3 + $0x10] sm:$0xff]
    %v587 = vld [vmem:[%s3 + $0x18] sm:$0xff]
    %v588 = vld [vmem:[%s3 + $0x20] sm:$0xff]
    %v589 = vld [vmem:[%s3 + $0x28] sm:$0xff]
    %v590 = vld [vmem:[%s3 + $0x30] sm:$0xff]
    %v591 = vld [vmem:[%s3 + $0x38] sm:$0xff]
    %v592 = vld [vmem:[%s3 + $0x40] sm:$0xff]
    %v593 = vld [vmem:[%s3 + $0x48] sm:$0xff]
    %v594 = vld [vmem:[%s3 + $0x50] sm:$0xff]
    %v595 = vld [vmem:[%s3 + $0x58] sm:$0xff]
    %v596 = vld [vmem:[%s3 + $0x60] sm:$0xff]
    %v597 = vld [vmem:[%s3 + $0x68] sm:$0xff]
    %v598 = vld [vmem:[%s3 + $0x70] sm:$0xff]
    %v599 = vld [vmem:[%s3 + $0x78] sm:$0xff]
    %v600 = vld [vmem:[%s3 + $0x80] sm:$0xff]
    %v601 = vld [vmem:[%s3 + $0x88] sm:$0xff]
    %v602 = vld [vmem:[%s3 + $0x90] sm:$0xff]
    %v603 = vld [vmem:[%s3 + $0x98] sm:$0xff]
    %v604 = vld [vmem:[%s3 + $0xa0] sm:$0xff]
    %v605 = vld [vmem:[%s3 + $0xa8] sm:$0xff]
    %v606 = vld [vmem:[%s3 + $0xb0] sm:$0xff]
    %v607 = vld [vmem:[%s3 + $0xb8] sm:$0xff]
    %v608 = vld [vmem:[%s3 + $0xc0] sm:$0xff]
    %v609 = vld [vmem:[%s3 + $0xc8] sm:$0xff]
    %v610 = vld [vmem:[%s3 + $0xd0] sm:$0xff]
    %v611 = vld [vmem:[%s3 + $0xd8] sm:$0xff]
    %v612 = vld [vmem:[%s3 + $0xe0] sm:$0xff]
    %v613 = vld [vmem:[%s3 + $0xe8] sm:$0xff]
    %v614 = vld [vmem:[%s3 + $0xf0] sm:$0xff]
    %v615 = vld [vmem:[%s3 + $0xf8] sm:$0xff]
    %v616 = vld [vmem:[%s3 + $0x100] sm:$0xff]
    %v617 = vld [vmem:[%s3 + $0x108] sm:$0xff]
    %v618 = vld [vmem:[%s3 + $0x110] sm:$0xff]
    %v619 = vld [vmem:[%s3 + $0x118] sm:$0xff]
    %v620 = vld [vmem:[%s3 + $0x120] sm:$0xff]
    %v621 = vld [vmem:[%s3 + $0x128] sm:$0xff]
    %v622 = vld [vmem:[%s3 + $0x130] sm:$0xff]
    %v623 = vld [vmem:[%s3 + $0x138] sm:$0xff]
    %v624 = vld [vmem:[%s3 + $0x140] sm:$0xff]
    %v625 = vld [vmem:[%s3 + $0x148] sm:$0xff]
    %v626 = vld [vmem:[%s3 + $0x150] sm:$0xff]
    %v627 = vld [vmem:[%s3 + $0x158] sm:$0xff]
    %v628 = vld [vmem:[%s3 + $0x160] sm:$0xff]
    %v629 = vld [vmem:[%s3 + $0x168] sm:$0xff]
    %v630 = vld [vmem:[%s3 + $0x170] sm:$0xff]
    %v631 = vld [vmem:[%s3 + $0x178] sm:$0xff]
    %v632 = vld [vmem:[%s3 + $0x180] sm:$0xff]
    %v633 = vld [vmem:[%s3 + $0x188] sm:$0xff]
    %v634 = vld [vmem:[%s3 + $0x190] sm:$0xff]
    %v635 = vld [vmem:[%s3 + $0x198] sm:$0xff]
    %v636 = vld [vmem:[%s3 + $0x1a0] sm:$0xff]
    %v637 = vld [vmem:[%s3 + $0x1a8] sm:$0xff]
    %v638 = vld [vmem:[%s3 + $0x1b0] sm:$0xff]
    %v639 = vld [vmem:[%s3 + $0x1b8] sm:$0xff]
    %v640 = vld [vmem:[%s3 + $0x1c0] sm:$0xff]
    %v641 = vld [vmem:[%s3 + $0x1c8] sm:$0xff]
    %v642 = vld [vmem:[%s3 + $0x1d0] sm:$0xff]
    %v643 = vld [vmem:[%s3 + $0x1d8] sm:$0xff]
    %v644 = vld [vmem:[%s3 + $0x1e0] sm:$0xff]
    %v645 = vld [vmem:[%s3 + $0x1e8] sm:$0xff]
    %v646 = vld [vmem:[%s3 + $0x1f0] sm:$0xff]
    %v647 = vld [vmem:[%s3 + $0x1f8] sm:$0xff]
    %v648 = vld [vmem:[%s3 + $0x200] sm:$0xff]
    %v649 = vld [vmem:[%s3 + $0x208] sm:$0xff]
    %v650 = vld [vmem:[%s3 + $0x210] sm:$0xff]
    %v651 = vld [vmem:[%s3 + $0x218] sm:$0xff]
    %v652 = vld [vmem:[%s3 + $0x220] sm:$0xff]
    %v653 = vld [vmem:[%s3 + $0x228] sm:$0xff]
    %v654 = vld [vmem:[%s3 + $0x230] sm:$0xff]
    %v655 = vld [vmem:[%s3 + $0x238] sm:$0xff]
    %v656 = vld [vmem:[%s3 + $0x240] sm:$0xff]
    %v657 = vld [vmem:[%s3 + $0x248] sm:$0xff]
    %v658 = vld [vmem:[%s3 + $0x250] sm:$0xff]
    %v659 = vld [vmem:[%s3 + $0x258] sm:$0xff]
    %v660 = vld [vmem:[%s3 + $0x260] sm:$0xff]
    %v661 = vld [vmem:[%s3 + $0x268] sm:$0xff]
    %v662 = vld [vmem:[%s3 + $0x270] sm:$0xff]
    %v663 = vld [vmem:[%s3 + $0x278] sm:$0xff]
    %v664 = vld [vmem:[%s4] sm:$0x3]
    %v666 = vlaneseq
    %v667 = vshrl.u32 %v666, 7
    %v668 = vsub.s32 0, %v667
    %v669 = vrot.slane %v664, %v668
    %v670 = vlaneseq
    %v671 = vshrl.u32 %v670, 7
    %v672 = vsub.s32 1, %v671
    %v673 = vrot.slane %v664, %v672
    %v756 = vunpack.c.l.b16 %v584
    %v757 = vunpack.c.h.b16 %v584
    %v758 = vunpack.c.l.b16 %v585
    %v759 = vunpack.c.h.b16 %v585
    %v760 = vunpack.c.l.b16 %v586
    %v761 = vunpack.c.h.b16 %v586
    %v762 = vunpack.c.l.b16 %v587
    %v763 = vunpack.c.h.b16 %v587
    %v764 = vunpack.c.l.b16 %v588
    %v765 = vunpack.c.h.b16 %v588
    %v766 = vunpack.c.l.b16 %v589
    %v767 = vunpack.c.h.b16 %v589
    %v768 = vunpack.c.l.b16 %v590
    %v769 = vunpack.c.h.b16 %v590
    %v770 = vunpack.c.l.b16 %v591
    %v771 = vunpack.c.h.b16 %v591
    %v772 = vunpack.c.l.b16 %v592
    %v773 = vunpack.c.h.b16 %v592
    %v774 = vunpack.c.l.b16 %v593
    %v775 = vunpack.c.h.b16 %v593
    %v776 = vunpack.c.l.b16 %v594
    %v777 = vunpack.c.h.b16 %v594
    %v778 = vunpack.c.l.b16 %v595
    %v779 = vunpack.c.h.b16 %v595
    %v780 = vunpack.c.l.b16 %v596
    %v781 = vunpack.c.h.b16 %v596
    %v782 = vunpack.c.l.b16 %v597
    %v783 = vunpack.c.h.b16 %v597
    %v784 = vunpack.c.l.b16 %v598
    %v785 = vunpack.c.h.b16 %v598
    %v786 = vunpack.c.l.b16 %v599
    %v787 = vunpack.c.h.b16 %v599
    %v788 = vunpack.c.l.b16 %v600
    %v789 = vunpack.c.h.b16 %v600
    %v790 = vunpack.c.l.b16 %v601
    %v791 = vunpack.c.h.b16 %v601
    %v792 = vunpack.c.l.b16 %v602
    %v793 = vunpack.c.h.b16 %v602
    %v794 = vunpack.c.l.b16 %v603
    %v795 = vunpack.c.h.b16 %v603
    %v796 = vunpack.c.l.b16 %v604
    %v797 = vunpack.c.h.b16 %v604
    %v798 = vunpack.c.l.b16 %v605
    %v799 = vunpack.c.h.b16 %v605
    %v800 = vunpack.c.l.b16 %v606
    %v801 = vunpack.c.h.b16 %v606
    %v802 = vunpack.c.l.b16 %v607
    %v803 = vunpack.c.h.b16 %v607
    %v804 = vunpack.c.l.b16 %v608
    %v805 = vunpack.c.h.b16 %v608
    %v806 = vunpack.c.l.b16 %v609
    %v807 = vunpack.c.h.b16 %v609
    %v808 = vunpack.c.l.b16 %v610
    %v809 = vunpack.c.h.b16 %v610
    %v810 = vunpack.c.l.b16 %v611
    %v811 = vunpack.c.h.b16 %v611
    %v812 = vunpack.c.l.b16 %v612
    %v813 = vunpack.c.h.b16 %v612
    %v814 = vunpack.c.l.b16 %v613
    %v815 = vunpack.c.h.b16 %v613
    %v816 = vunpack.c.l.b16 %v614
    %v817 = vunpack.c.h.b16 %v614
    %v818 = vunpack.c.l.b16 %v615
    %v819 = vunpack.c.h.b16 %v615
    %v820 = vunpack.c.l.b16 %v616
    %v821 = vunpack.c.h.b16 %v616
    %v822 = vunpack.c.l.b16 %v617
    %v823 = vunpack.c.h.b16 %v617
    %v824 = vunpack.c.l.b16 %v618
    %v825 = vunpack.c.h.b16 %v618
    %v826 = vunpack.c.l.b16 %v619
    %v827 = vunpack.c.h.b16 %v619
    %v828 = vunpack.c.l.b16 %v620
    %v829 = vunpack.c.h.b16 %v620
    %v830 = vunpack.c.l.b16 %v621
    %v831 = vunpack.c.h.b16 %v621
    %v832 = vunpack.c.l.b16 %v622
    %v833 = vunpack.c.h.b16 %v622
    %v834 = vunpack.c.l.b16 %v623
    %v835 = vunpack.c.h.b16 %v623
    %v836 = vunpack.c.l.b16 %v624
    %v837 = vunpack.c.h.b16 %v624
    %v838 = vunpack.c.l.b16 %v625
    %v839 = vunpack.c.h.b16 %v625
    %v840 = vunpack.c.l.b16 %v626
    %v841 = vunpack.c.h.b16 %v626
    %v842 = vunpack.c.l.b16 %v627
    %v843 = vunpack.c.h.b16 %v627
    %v844 = vunpack.c.l.b16 %v628
    %v845 = vunpack.c.h.b16 %v628
    %v846 = vunpack.c.l.b16 %v629
    %v847 = vunpack.c.h.b16 %v629
    %v848 = vunpack.c.l.b16 %v630
    %v849 = vunpack.c.h.b16 %v630
    %v850 = vunpack.c.l.b16 %v631
    %v851 = vunpack.c.h.b16 %v631
    %v852 = vunpack.c.l.b16 %v632
    %v853 = vunpack.c.h.b16 %v632
    %v854 = vunpack.c.l.b16 %v633
    %v855 = vunpack.c.h.b16 %v633
    %v856 = vunpack.c.l.b16 %v634
    %v857 = vunpack.c.h.b16 %v634
    %v858 = vunpack.c.l.b16 %v635
    %v859 = vunpack.c.h.b16 %v635
    %v860 = vunpack.c.l.b16 %v636
    %v861 = vunpack.c.h.b16 %v636
    %v862 = vunpack.c.l.b16 %v637
    %v863 = vunpack.c.h.b16 %v637
    %v864 = vunpack.c.l.b16 %v638
    %v865 = vunpack.c.h.b16 %v638
    %v866 = vunpack.c.l.b16 %v639
    %v867 = vunpack.c.h.b16 %v639
    %v868 = vunpack.c.l.b16 %v640
    %v869 = vunpack.c.h.b16 %v640
    %v870 = vunpack.c.l.b16 %v641
    %v871 = vunpack.c.h.b16 %v641
    %v872 = vunpack.c.l.b16 %v642
    %v873 = vunpack.c.h.b16 %v642
    %v874 = vunpack.c.l.b16 %v643
    %v875 = vunpack.c.h.b16 %v643
    %v876 = vunpack.c.l.b16 %v644
    %v877 = vunpack.c.h.b16 %v644
    %v878 = vunpack.c.l.b16 %v645
    %v879 = vunpack.c.h.b16 %v645
    %v880 = vunpack.c.l.b16 %v646
    %v881 = vunpack.c.h.b16 %v646
    %v882 = vunpack.c.l.b16 %v647
    %v883 = vunpack.c.h.b16 %v647
    %v884 = vunpack.c.l.b16 %v648
    %v885 = vunpack.c.h.b16 %v648
    %v886 = vunpack.c.l.b16 %v649
    %v887 = vunpack.c.h.b16 %v649
    %v888 = vunpack.c.l.b16 %v650
    %v889 = vunpack.c.h.b16 %v650
    %v890 = vunpack.c.l.b16 %v651
    %v891 = vunpack.c.h.b16 %v651
    %v892 = vunpack.c.l.b16 %v652
    %v893 = vunpack.c.h.b16 %v652
    %v894 = vunpack.c.l.b16 %v653
    %v895 = vunpack.c.h.b16 %v653
    %v896 = vunpack.c.l.b16 %v654
    %v897 = vunpack.c.h.b16 %v654
    %v898 = vunpack.c.l.b16 %v655
    %v899 = vunpack.c.h.b16 %v655
    %v900 = vunpack.c.l.b16 %v656
    %v901 = vunpack.c.h.b16 %v656
    %v902 = vunpack.c.l.b16 %v657
    %v903 = vunpack.c.h.b16 %v657
    %v904 = vunpack.c.l.b16 %v658
    %v905 = vunpack.c.h.b16 %v658
    %v906 = vunpack.c.l.b16 %v659
    %v907 = vunpack.c.h.b16 %v659
    %v908 = vunpack.c.l.b16 %v660
    %v909 = vunpack.c.h.b16 %v660
    %v910 = vunpack.c.l.b16 %v661
    %v911 = vunpack.c.h.b16 %v661
    %v912 = vunpack.c.l.b16 %v662
    %v913 = vunpack.c.h.b16 %v662
    %v914 = vunpack.c.l.b16 %v663
    %v915 = vunpack.c.h.b16 %v663
    %v916 = vpack.c.b16 %v758, %v756
    %v917 = vpack.c.b16 %v759, %v757
    %v918 = vpack.c.b16 %v762, %v760
    %v919 = vpack.c.b16 %v763, %v761
    %v920 = vpack.c.b16 %v766, %v764
    %v921 = vpack.c.b16 %v767, %v765
    %v922 = vpack.c.b16 %v770, %v768
    %v923 = vpack.c.b16 %v771, %v769
    %v924 = vpack.c.b16 %v774, %v772
    %v925 = vpack.c.b16 %v775, %v773
    %v926 = vpack.c.b16 %v778, %v776
    %v927 = vpack.c.b16 %v779, %v777
    %v928 = vpack.c.b16 %v782, %v780
    %v929 = vpack.c.b16 %v783, %v781
    %v930 = vpack.c.b16 %v786, %v784
    %v931 = vpack.c.b16 %v787, %v785
    %v932 = vpack.c.b16 %v790, %v788
    %v933 = vpack.c.b16 %v791, %v789
    %v934 = vpack.c.b16 %v794, %v792
    %v935 = vpack.c.b16 %v795, %v793
    %v936 = vpack.c.b16 %v798, %v796
    %v937 = vpack.c.b16 %v799, %v797
    %v938 = vpack.c.b16 %v802, %v800
    %v939 = vpack.c.b16 %v803, %v801
    %v940 = vpack.c.b16 %v806, %v804
    %v941 = vpack.c.b16 %v807, %v805
    %v942 = vpack.c.b16 %v810, %v808
    %v943 = vpack.c.b16 %v811, %v809
    %v944 = vpack.c.b16 %v814, %v812
    %v945 = vpack.c.b16 %v815, %v813
    %v946 = vpack.c.b16 %v818, %v816
    %v947 = vpack.c.b16 %v819, %v817
    %v948 = vpack.c.b16 %v822, %v820
    %v949 = vpack.c.b16 %v823, %v821
    %v950 = vpack.c.b16 %v826, %v824
    %v951 = vpack.c.b16 %v827, %v825
    %v952 = vpack.c.b16 %v830, %v828
    %v953 = vpack.c.b16 %v831, %v829
    %v954 = vpack.c.b16 %v834, %v832
    %v955 = vpack.c.b16 %v835, %v833
    %v956 = vpack.c.b16 %v838, %v836
    %v957 = vpack.c.b16 %v839, %v837
    %v958 = vpack.c.b16 %v842, %v840
    %v959 = vpack.c.b16 %v843, %v841
    %v960 = vpack.c.b16 %v846, %v844
    %v961 = vpack.c.b16 %v847, %v845
    %v962 = vpack.c.b16 %v850, %v848
    %v963 = vpack.c.b16 %v851, %v849
    %v964 = vpack.c.b16 %v854, %v852
    %v965 = vpack.c.b16 %v855, %v853
    %v966 = vpack.c.b16 %v858, %v856
    %v967 = vpack.c.b16 %v859, %v857
    %v968 = vpack.c.b16 %v862, %v860
    %v969 = vpack.c.b16 %v863, %v861
    %v970 = vpack.c.b16 %v866, %v864
    %v971 = vpack.c.b16 %v867, %v865
    %v972 = vpack.c.b16 %v870, %v868
    %v973 = vpack.c.b16 %v871, %v869
    %v974 = vpack.c.b16 %v874, %v872
    %v975 = vpack.c.b16 %v875, %v873
    %v976 = vpack.c.b16 %v878, %v876
    %v977 = vpack.c.b16 %v879, %v877
    %v978 = vpack.c.b16 %v882, %v880
    %v979 = vpack.c.b16 %v883, %v881
    %v980 = vpack.c.b16 %v886, %v884
    %v981 = vpack.c.b16 %v887, %v885
    %v982 = vpack.c.b16 %v890, %v888
    %v983 = vpack.c.b16 %v891, %v889
    %v984 = vpack.c.b16 %v894, %v892
    %v985 = vpack.c.b16 %v895, %v893
    %v986 = vpack.c.b16 %v898, %v896
    %v987 = vpack.c.b16 %v899, %v897
    %v988 = vpack.c.b16 %v902, %v900
    %v989 = vpack.c.b16 %v903, %v901
    %v990 = vpack.c.b16 %v906, %v904
    %v991 = vpack.c.b16 %v907, %v905
    %v992 = vpack.c.b16 %v910, %v908
    %v993 = vpack.c.b16 %v911, %v909
    %v994 = vpack.c.b16 %v914, %v912
    %v995 = vpack.c.b16 %v915, %v913
    %1076 = vmatprep.subr.bf16.mxu0 %v931
    %1077 = vmatpush1.bf16.msra.mxu0 %v930
    %1078 = vmatprep.subr.bf16.mxu0 %v929
    %1079 = vmatpush1.bf16.msra.mxu0 %v928
    %1080 = vmatprep.subr.bf16.mxu0 %v927
    %1081 = vmatpush1.bf16.msra.mxu0 %v926
    %1082 = vmatprep.subr.bf16.mxu0 %v925
    %1083 = vmatpush1.bf16.msra.mxu0 %v924
    %1084 = vmatprep.subr.bf16.mxu0 %v923
    %1085 = vmatpush1.bf16.msra.mxu0 %v922
    %1086 = vmatprep.subr.bf16.mxu0 %v921
    %1087 = vmatpush1.bf16.msra.mxu0 %v920
    %1088 = vmatprep.subr.bf16.mxu0 %v919
    %1089 = vmatpush1.bf16.msra.mxu0 %v918
    %1090 = vmatprep.subr.bf16.mxu0 %v917
    %1091 = vmatpush1.bf16.msra.mxu0 %v916
    %1092 = vmatprep.subr.bf16.mxu0 %v947
    %1093 = vmatpush2.bf16.msra.mxu0 %v946
    %1094 = vmatprep.subr.bf16.mxu0 %v945
    %1095 = vmatpush2.bf16.msra.mxu0 %v944
    %1096 = vmatprep.subr.bf16.mxu0 %v943
    %1097 = vmatpush2.bf16.msra.mxu0 %v942
    %1098 = vmatprep.subr.bf16.mxu0 %v941
    %1099 = vmatpush2.bf16.msra.mxu0 %v940
    %1100 = vmatprep.subr.bf16.mxu0 %v939
    %1101 = vmatpush2.bf16.msra.mxu0 %v938
    %1102 = vmatprep.subr.bf16.mxu0 %v937
    %1103 = vmatpush2.bf16.msra.mxu0 %v936
    %1104 = vmatprep.subr.bf16.mxu0 %v935
    %1105 = vmatpush2.bf16.msra.mxu0 %v934
    %1106 = vmatprep.subr.bf16.mxu0 %v933
    %1107 = vmatpush2.bf16.msra.mxu0 %v932
    %1108 = vmatprep.mubr.bf16.mxu0 %v572
    %1109 = vmatmul.mubr.bf16.gmra.mxu0 %v571
    %v1110 = vpop.f32.mrf.mxu0
    %v1111 = vadd.f32 %v669, %v1110
    %v1112 = vpop.f32.mrf.mxu0
    %v1113 = vadd.f32 %v673, %v1112
    %v1114 = vpop.f32.mrf.mxu0
    %v1115 = vadd.f32 %v669, %v1114
    %v1116 = vpop.f32.mrf.mxu0
    %v1117 = vadd.f32 %v673, %v1116
    %1118 = vmatprep.mubr.bf16.mxu0 %v574
    %1119 = vmatmul.mubr.bf16.gmra.mxu0 %v573
    %v1120 = vpop.f32.mrf.mxu0
    %v1121 = vadd.f32 %v669, %v1120
    %v1122 = vpop.f32.mrf.mxu0
    %v1123 = vadd.f32 %v673, %v1122
    %v1124 = vpop.f32.mrf.mxu0
    %v1125 = vadd.f32 %v669, %v1124
    %v1126 = vpop.f32.mrf.mxu0
    %v1127 = vadd.f32 %v673, %v1126
    %1128 = vmatprep.mubr.bf16.mxu0 %v576
    %1129 = vmatmul.mubr.bf16.gmra.mxu0 %v575
    %v1130 = vpop.f32.mrf.mxu0
    %v1131 = vadd.f32 %v669, %v1130
    %v1132 = vpop.f32.mrf.mxu0
    %v1133 = vadd.f32 %v673, %v1132
    %v1134 = vpop.f32.mrf.mxu0
    %v1135 = vadd.f32 %v669, %v1134
    %v1136 = vpop.f32.mrf.mxu0
    %v1137 = vadd.f32 %v673, %v1136
    %1138 = vmatprep.mubr.bf16.mxu0 %v578
    %1139 = vmatmul.mubr.bf16.gmra.mxu0 %v577
    %v1140 = vpop.f32.mrf.mxu0
    %v1141 = vadd.f32 %v669, %v1140
    %v1142 = vpop.f32.mrf.mxu0
    %v1143 = vadd.f32 %v673, %v1142
    %v1144 = vpop.f32.mrf.mxu0
    %v1145 = vadd.f32 %v669, %v1144
    %v1146 = vpop.f32.mrf.mxu0
    %v1147 = vadd.f32 %v673, %v1146
    %1148 = vmatprep.mubr.bf16.mxu0 %v580
    %1149 = vmatmul.mubr.bf16.gmra.mxu0 %v579
    %v1150 = vpop.f32.mrf.mxu0
    %v1151 = vadd.f32 %v669, %v1150
    %v1152 = vpop.f32.mrf.mxu0
    %v1153 = vadd.f32 %v673, %v1152
    %v1154 = vpop.f32.mrf.mxu0
    %v1155 = vadd.f32 %v669, %v1154
    %v1156 = vpop.f32.mrf.mxu0
    %v1157 = vadd.f32 %v673, %v1156
    %1158 = vdwg.mxu0
    %1159 = vmatprep.subr.bf16.mxu0 %v963
    %1160 = vmatpush1.bf16.msra.mxu0 %v962
    %1161 = vmatprep.subr.bf16.mxu0 %v961
    %1162 = vmatpush1.bf16.msra.mxu0 %v960
    %1163 = vmatprep.subr.bf16.mxu0 %v959
    %1164 = vmatpush1.bf16.msra.mxu0 %v958
    %1165 = vmatprep.subr.bf16.mxu0 %v957
    %1166 = vmatpush1.bf16.msra.mxu0 %v956
    %1167 = vmatprep.subr.bf16.mxu0 %v955
    %1168 = vmatpush1.bf16.msra.mxu0 %v954
    %1169 = vmatprep.subr.bf16.mxu0 %v953
    %1170 = vmatpush1.bf16.msra.mxu0 %v952
    %1171 = vmatprep.subr.bf16.mxu0 %v951
    %1172 = vmatpush1.bf16.msra.mxu0 %v950
    %1173 = vmatprep.subr.bf16.mxu0 %v949
    %1174 = vmatpush1.bf16.msra.mxu0 %v948
    %1175 = vmatprep.subr.bf16.mxu0 %v979
    %1176 = vmatpush2.bf16.msra.mxu0 %v978
    %1177 = vmatprep.subr.bf16.mxu0 %v977
    %1178 = vmatpush2.bf16.msra.mxu0 %v976
    %1179 = vmatprep.subr.bf16.mxu0 %v975
    %1180 = vmatpush2.bf16.msra.mxu0 %v974
    %1181 = vmatprep.subr.bf16.mxu0 %v973
    %1182 = vmatpush2.bf16.msra.mxu0 %v972
    %1183 = vmatprep.subr.bf16.mxu0 %v971
    %1184 = vmatpush2.bf16.msra.mxu0 %v970
    %1185 = vmatprep.subr.bf16.mxu0 %v969
    %1186 = vmatpush2.bf16.msra.mxu0 %v968
    %1187 = vmatprep.subr.bf16.mxu0 %v967
    %1188 = vmatpush2.bf16.msra.mxu0 %v966
    %1189 = vmatprep.subr.bf16.mxu0 %v965
    %1190 = vmatpush2.bf16.msra.mxu0 %v964
    %1191 = vmatprep.mubr.bf16.mxu0 %v574
    %1192 = vmatmul.mubr.bf16.gmra.mxu0 %v573
    %v1193 = vpop.f32.mrf.mxu0
    %v1194 = vadd.f32 %v1111, %v1193
    %v1195 = vpop.f32.mrf.mxu0
    %v1196 = vadd.f32 %v1113, %v1195
    %v1197 = vpop.f32.mrf.mxu0
    %v1198 = vadd.f32 %v1115, %v1197
    %v1199 = vpop.f32.mrf.mxu0
    %v1200 = vadd.f32 %v1117, %v1199
    %1201 = vmatprep.mubr.bf16.mxu0 %v576
    %1202 = vmatmul.mubr.bf16.gmra.mxu0 %v575
    %v1203 = vpop.f32.mrf.mxu0
    %v1204 = vadd.f32 %v1121, %v1203
    %v1205 = vpop.f32.mrf.mxu0
    %v1206 = vadd.f32 %v1123, %v1205
    %v1207 = vpop.f32.mrf.mxu0
    %v1208 = vadd.f32 %v1125, %v1207
    %v1209 = vpop.f32.mrf.mxu0
    %v1210 = vadd.f32 %v1127, %v1209
    %1211 = vmatprep.mubr.bf16.mxu0 %v578
    %1212 = vmatmul.mubr.bf16.gmra.mxu0 %v577
    %v1213 = vpop.f32.mrf.mxu0
    %v1214 = vadd.f32 %v1131, %v1213
    %v1215 = vpop.f32.mrf.mxu0
    %v1216 = vadd.f32 %v1133, %v1215
    %v1217 = vpop.f32.mrf.mxu0
    %v1218 = vadd.f32 %v1135, %v1217
    %v1219 = vpop.f32.mrf.mxu0
    %v1220 = vadd.f32 %v1137, %v1219
    %1221 = vmatprep.mubr.bf16.mxu0 %v580
    %1222 = vmatmul.mubr.bf16.gmra.mxu0 %v579
    %v1223 = vpop.f32.mrf.mxu0
    %v1224 = vadd.f32 %v1141, %v1223
    %v1225 = vpop.f32.mrf.mxu0
    %v1226 = vadd.f32 %v1143, %v1225
    %v1227 = vpop.f32.mrf.mxu0
    %v1228 = vadd.f32 %v1145, %v1227
    %v1229 = vpop.f32.mrf.mxu0
    %v1230 = vadd.f32 %v1147, %v1229
    %1231 = vmatprep.mubr.bf16.mxu0 %v582
    %1232 = vmatmul.mubr.bf16.gmra.mxu0 %v581
    %v1233 = vpop.f32.mrf.mxu0
    %v1234 = vadd.f32 %v1151, %v1233
    %v1235 = vpop.f32.mrf.mxu0
    %v1236 = vadd.f32 %v1153, %v1235
    %v1237 = vpop.f32.mrf.mxu0
    %v1238 = vadd.f32 %v1155, %v1237
    %v1239 = vpop.f32.mrf.mxu0
    %v1240 = vadd.f32 %v1157, %v1239
    %1241 = vdwg.mxu0
    %1242 = vmatprep.subr.bf16.mxu0 %v995
    %1243 = vmatpush1.bf16.msra.mxu0 %v994
    %1244 = vmatprep.subr.bf16.mxu0 %v993
    %1245 = vmatpush1.bf16.msra.mxu0 %v992
    %1246 = vmatprep.subr.bf16.mxu0 %v991
    %1247 = vmatpush1.bf16.msra.mxu0 %v990
    %1248 = vmatprep.subr.bf16.mxu0 %v989
    %1249 = vmatpush1.bf16.msra.mxu0 %v988
    %1250 = vmatprep.subr.bf16.mxu0 %v987
    %1251 = vmatpush1.bf16.msra.mxu0 %v986
    %1252 = vmatprep.subr.bf16.mxu0 %v985
    %1253 = vmatpush1.bf16.msra.mxu0 %v984
    %1254 = vmatprep.subr.bf16.mxu0 %v983
    %1255 = vmatpush1.bf16.msra.mxu0 %v982
    %1256 = vmatprep.subr.bf16.mxu0 %v981
    %1257 = vmatpush1.bf16.msra.mxu0 %v980
    %1258 = vmatprep.subr.bf16.mxu0 0
    %1259 = vmatpush2.bf16.msra.mxu0 0
    %1260 = vmatprep.subr.bf16.mxu0 0
    %1261 = vmatpush2.bf16.msra.mxu0 0
    %1262 = vmatprep.subr.bf16.mxu0 0
    %1263 = vmatpush2.bf16.msra.mxu0 0
    %1264 = vmatprep.subr.bf16.mxu0 0
    %1265 = vmatpush2.bf16.msra.mxu0 0
    %1266 = vmatprep.subr.bf16.mxu0 0
    %1267 = vmatpush2.bf16.msra.mxu0 0
    %1268 = vmatprep.subr.bf16.mxu0 0
    %1269 = vmatpush2.bf16.msra.mxu0 0
    %1270 = vmatprep.subr.bf16.mxu0 0
    %1271 = vmatpush2.bf16.msra.mxu0 0
    %1272 = vmatprep.subr.bf16.mxu0 0
    %1273 = vmatpush2.bf16.msra.mxu0 0
    %1274 = vmatprep.mubr.bf16.mxu0 0
    %1275 = vmatmul.mubr.bf16.gmra.mxu0 %v575
    %v1276 = vpop.f32.mrf.mxu0
    %v1277 = vadd.f32 %v1194, %v1276
    %v1278 = vpop.f32.mrf.mxu0
    %v1279 = vadd.f32 %v1196, %v1278
    %v1280 = vpop.f32.mrf.mxu0
    %v1281 = vadd.f32 %v1198, %v1280
    %v1282 = vpop.f32.mrf.mxu0
    %v1283 = vadd.f32 %v1200, %v1282
    %1284 = vmatprep.mubr.bf16.mxu0 0
    %1285 = vmatmul.mubr.bf16.gmra.mxu0 %v577
    %v1286 = vpop.f32.mrf.mxu0
    %v1287 = vadd.f32 %v1204, %v1286
    %v1288 = vpop.f32.mrf.mxu0
    %v1289 = vadd.f32 %v1206, %v1288
    %v1290 = vpop.f32.mrf.mxu0
    %v1291 = vadd.f32 %v1208, %v1290
    %v1292 = vpop.f32.mrf.mxu0
    %v1293 = vadd.f32 %v1210, %v1292
    %1294 = vmatprep.mubr.bf16.mxu0 0
    %1295 = vmatmul.mubr.bf16.gmra.mxu0 %v579
    %v1296 = vpop.f32.mrf.mxu0
    %v1297 = vadd.f32 %v1214, %v1296
    %v1298 = vpop.f32.mrf.mxu0
    %v1299 = vadd.f32 %v1216, %v1298
    %v1300 = vpop.f32.mrf.mxu0
    %v1301 = vadd.f32 %v1218, %v1300
    %v1302 = vpop.f32.mrf.mxu0
    %v1303 = vadd.f32 %v1220, %v1302
    %1304 = vmatprep.mubr.bf16.mxu0 0
    %1305 = vmatmul.mubr.bf16.gmra.mxu0 %v581
    %v1306 = vpop.f32.mrf.mxu0
    %v1307 = vadd.f32 %v1224, %v1306
    %v1308 = vpop.f32.mrf.mxu0
    %v1309 = vadd.f32 %v1226, %v1308
    %v1310 = vpop.f32.mrf.mxu0
    %v1311 = vadd.f32 %v1228, %v1310
    %v1312 = vpop.f32.mrf.mxu0
    %v1313 = vadd.f32 %v1230, %v1312
    %1314 = vmatprep.mubr.bf16.mxu0 0
    %1315 = vmatmul.mubr.bf16.gmra.mxu0 %v583
    %v1316 = vpop.f32.mrf.mxu0
    %v1317 = vadd.f32 %v1234, %v1316
    %v1318 = vpop.f32.mrf.mxu0
    %v1319 = vadd.f32 %v1236, %v1318
    %v1320 = vpop.f32.mrf.mxu0
    %v1321 = vadd.f32 %v1238, %v1320
    %v1322 = vpop.f32.mrf.mxu0
    %v1323 = vadd.f32 %v1240, %v1322
    %1324 = vdwg.mxu0
    %v1325 = vmax.f32 %v1277, 0.0
    %v1326 = vmax.f32 %v1279, 0.0
    %v1327 = vmax.f32 %v1281, 0.0
    %v1328 = vmax.f32 %v1283, 0.0
    %v1329 = vmax.f32 %v1287, 0.0
    %v1330 = vmax.f32 %v1289, 0.0
    %v1331 = vmax.f32 %v1291, 0.0
    %v1332 = vmax.f32 %v1293, 0.0
    %v1333 = vmax.f32 %v1297, 0.0
    %v1334 = vmax.f32 %v1299, 0.0
    %v1335 = vmax.f32 %v1301, 0.0
    %v1336 = vmax.f32 %v1303, 0.0
    %v1337 = vmax.f32 %v1307, 0.0
    %v1338 = vmax.f32 %v1309, 0.0
    %v1339 = vmax.f32 %v1311, 0.0
    %v1340 = vmax.f32 %v1313, 0.0
    %v1341 = vmax.f32 %v1317, 0.0
    %v1342 = vmax.f32 %v1319, 0.0
    %v1343 = vmax.f32 %v1321, 0.0
    %v1344 = vmax.f32 %v1323, 0.0
    %v1345 = vmax.f32 %v1325, %v1327
    %v1346 = vmax.f32 %v1326, %v1328
    %v1347 = vmax.f32 %v1345, %v1346
    %v1348 = vmax.f32 %v1329, %v1331
    %v1349 = vmax.f32 %v1330, %v1332
    %v1350 = vmax.f32 %v1348, %v1349
    %v1351 = vmax.f32 %v1333, %v1335
    %v1352 = vmax.f32 %v1334, %v1336
    %v1353 = vmax.f32 %v1351, %v1352
    %v1354 = vmax.f32 %v1337, %v1339
    %v1355 = vmax.f32 %v1338, %v1340
    %v1356 = vmax.f32 %v1354, %v1355
    %v1357 = vmax.f32 %v1341, %v1343
    %v1358 = vmax.f32 %v1342, %v1344
    %v1359 = vmax.f32 %v1357, %v1358
    %v1360 = vpack.c.bf16 %v1347, %v1347
    %v1361 = vpack.c.bf16 %v1350, %v1350
    %v1362 = vpack.c.bf16 %v1353, %v1353
    %v1363 = vpack.c.bf16 %v1356, %v1356
    %v1364 = vpack.c.bf16 %v1359, %v1359
    %v1365 = vld [vmem:[%s5] sm:$0xf]
    %v1366 = vld [vmem:[%s5 + $0x4] sm:$0xf]
    %v1367 = vld [vmem:[%s5 + $0x8] sm:$0xf]
    %v1368 = vld [vmem:[%s5 + $0xc] sm:$0xf]
    %v1369 = vld [vmem:[%s5 + $0x10] sm:$0xf]
    %v1370 = vld [vmem:[%s5 + $0x14] sm:$0xf]
    %v1371 = vld [vmem:[%s5 + $0x18] sm:$0xf]
    %v1372 = vld [vmem:[%s5 + $0x1c] sm:$0xf]
    %v1373 = vld [vmem:[%s5 + $0x20] sm:$0xf]
    %v1374 = vld [vmem:[%s5 + $0x24] sm:$0xf]
    %v1375 = vld [vmem:[%s5 + $0x28] sm:$0xf]
    %v1376 = vld [vmem:[%s5 + $0x2c] sm:$0xf]
    %v1377 = vld [vmem:[%s5 + $0x30] sm:$0xf]
    %v1378 = vld [vmem:[%s5 + $0x34] sm:$0xf]
    %v1379 = vld [vmem:[%s5 + $0x38] sm:$0xf]
    %v1380 = vld [vmem:[%s5 + $0x3c] sm:$0xf]
    %v1381 = vld [vmem:[%s5 + $0x40] sm:$0xf]
    %v1382 = vld [vmem:[%s5 + $0x44] sm:$0xf]
    %v1383 = vld [vmem:[%s5 + $0x48] sm:$0xf]
    %v1384 = vld [vmem:[%s5 + $0x4c] sm:$0xf]
    %v1385 = vld [vmem:[%s5 + $0x50] sm:$0xf]
    %v1386 = vld [vmem:[%s5 + $0x54] sm:$0xf]
    %v1387 = vld [vmem:[%s5 + $0x58] sm:$0xf]
    %v1388 = vld [vmem:[%s5 + $0x5c] sm:$0xf]
    %v1389 = vld [vmem:[%s5 + $0x60] sm:$0xf]
    %v1390 = vld [vmem:[%s5 + $0x64] sm:$0xf]
    %v1391 = vld [vmem:[%s5 + $0x68] sm:$0xf]
    %v1392 = vld [vmem:[%s5 + $0x6c] sm:$0xf]
    %v1393 = vld [vmem:[%s5 + $0x70] sm:$0xf]
    %v1394 = vld [vmem:[%s5 + $0x74] sm:$0xf]
    %v1395 = vld [vmem:[%s5 + $0x78] sm:$0xf]
    %v1396 = vld [vmem:[%s5 + $0x7c] sm:$0xf]
    %v1397 = vld [vmem:[%s5 + $0x80] sm:$0xf]
    %v1398 = vld [vmem:[%s5 + $0x84] sm:$0xf]
    %v1399 = vld [vmem:[%s5 + $0x88] sm:$0xf]
    %v1400 = vld [vmem:[%s5 + $0x8c] sm:$0xf]
    %v1401 = vld [vmem:[%s5 + $0x90] sm:$0xf]
    %v1402 = vld [vmem:[%s5 + $0x94] sm:$0xf]
    %v1403 = vld [vmem:[%s5 + $0x98] sm:$0xf]
    %v1404 = vld [vmem:[%s5 + $0x9c] sm:$0xf]
    %v1405 = vld [vmem:[%s5 + $0xa0] sm:$0xf]
    %v1406 = vld [vmem:[%s5 + $0xa4] sm:$0xf]
    %v1407 = vld [vmem:[%s5 + $0xa8] sm:$0xf]
    %v1408 = vld [vmem:[%s5 + $0xac] sm:$0xf]
    %v1409 = vld [vmem:[%s5 + $0xb0] sm:$0xf]
    %v1410 = vld [vmem:[%s5 + $0xb4] sm:$0xf]
    %v1411 = vld [vmem:[%s5 + $0xb8] sm:$0xf]
    %v1412 = vld [vmem:[%s5 + $0xbc] sm:$0xf]
    %v1413 = vld [vmem:[%s5 + $0xc0] sm:$0xf]
    %v1414 = vld [vmem:[%s5 + $0xc4] sm:$0xf]
    %v1415 = vld [vmem:[%s5 + $0xc8] sm:$0xf]
    %v1416 = vld [vmem:[%s5 + $0xcc] sm:$0xf]
    %v1417 = vld [vmem:[%s5 + $0xd0] sm:$0xf]
    %v1418 = vld [vmem:[%s5 + $0xd4] sm:$0xf]
    %v1419 = vld [vmem:[%s5 + $0xd8] sm:$0xf]
    %v1420 = vld [vmem:[%s5 + $0xdc] sm:$0xf]
    %v1421 = vld [vmem:[%s5 + $0xe0] sm:$0xf]
    %v1422 = vld [vmem:[%s5 + $0xe4] sm:$0xf]
    %v1423 = vld [vmem:[%s5 + $0xe8] sm:$0xf]
    %v1424 = vld [vmem:[%s5 + $0xec] sm:$0xf]
    %v1425 = vld [vmem:[%s5 + $0xf0] sm:$0xf]
    %v1426 = vld [vmem:[%s5 + $0xf4] sm:$0xf]
    %v1427 = vld [vmem:[%s5 + $0xf8] sm:$0xf]
    %v1428 = vld [vmem:[%s5 + $0xfc] sm:$0xf]
    %v1429 = vld [vmem:[%s5 + $0x100] sm:$0xf]
    %v1430 = vld [vmem:[%s5 + $0x104] sm:$0xf]
    %v1431 = vld [vmem:[%s5 + $0x108] sm:$0xf]
    %v1432 = vld [vmem:[%s5 + $0x10c] sm:$0xf]
    %v1433 = vld [vmem:[%s5 + $0x110] sm:$0xf]
    %v1434 = vld [vmem:[%s5 + $0x114] sm:$0xf]
    %v1435 = vld [vmem:[%s5 + $0x118] sm:$0xf]
    %v1436 = vld [vmem:[%s5 + $0x11c] sm:$0xf]
    %v1437 = vld [vmem:[%s5 + $0x120] sm:$0xf]
    %v1438 = vld [vmem:[%s5 + $0x124] sm:$0xf]
    %v1439 = vld [vmem:[%s5 + $0x128] sm:$0xf]
    %v1440 = vld [vmem:[%s5 + $0x12c] sm:$0xf]
    %v1441 = vld [vmem:[%s5 + $0x130] sm:$0xf]
    %v1442 = vld [vmem:[%s5 + $0x134] sm:$0xf]
    %v1443 = vld [vmem:[%s5 + $0x138] sm:$0xf]
    %v1444 = vld [vmem:[%s5 + $0x13c] sm:$0xf]
    %v1445 = vld [vmem:[%s6] sm:$0x1]
    %v1447 = vlaneseq
    %v1448 = vshrl.u32 %v1447, 7
    %v1449 = vsub.s32 0, %v1448
    %v1450 = vrot.slane %v1445, %v1449
    %v1532 = vunpack.c.l.b16 %v1365
    %v1533 = vunpack.c.l.b16 %v1366
    %v1534 = vunpack.c.l.b16 %v1367
    %v1535 = vunpack.c.l.b16 %v1368
    %v1536 = vunpack.c.l.b16 %v1369
    %v1537 = vunpack.c.l.b16 %v1370
    %v1538 = vunpack.c.l.b16 %v1371
    %v1539 = vunpack.c.l.b16 %v1372
    %v1540 = vunpack.c.l.b16 %v1373
    %v1541 = vunpack.c.l.b16 %v1374
    %v1542 = vunpack.c.l.b16 %v1375
    %v1543 = vunpack.c.l.b16 %v1376
    %v1544 = vunpack.c.l.b16 %v1377
    %v1545 = vunpack.c.l.b16 %v1378
    %v1546 = vunpack.c.l.b16 %v1379
    %v1547 = vunpack.c.l.b16 %v1380
    %v1548 = vunpack.c.l.b16 %v1381
    %v1549 = vunpack.c.l.b16 %v1382
    %v1550 = vunpack.c.l.b16 %v1383
    %v1551 = vunpack.c.l.b16 %v1384
    %v1552 = vunpack.c.l.b16 %v1385
    %v1553 = vunpack.c.l.b16 %v1386
    %v1554 = vunpack.c.l.b16 %v1387
    %v1555 = vunpack.c.l.b16 %v1388
    %v1556 = vunpack.c.l.b16 %v1389
    %v1557 = vunpack.c.l.b16 %v1390
    %v1558 = vunpack.c.l.b16 %v1391
    %v1559 = vunpack.c.l.b16 %v1392
    %v1560 = vunpack.c.l.b16 %v1393
    %v1561 = vunpack.c.l.b16 %v1394
    %v1562 = vunpack.c.l.b16 %v1395
    %v1563 = vunpack.c.l.b16 %v1396
    %v1564 = vunpack.c.l.b16 %v1397
    %v1565 = vunpack.c.l.b16 %v1398
    %v1566 = vunpack.c.l.b16 %v1399
    %v1567 = vunpack.c.l.b16 %v1400
    %v1568 = vunpack.c.l.b16 %v1401
    %v1569 = vunpack.c.l.b16 %v1402
    %v1570 = vunpack.c.l.b16 %v1403
    %v1571 = vunpack.c.l.b16 %v1404
    %v1572 = vunpack.c.l.b16 %v1405
    %v1573 = vunpack.c.l.b16 %v1406
    %v1574 = vunpack.c.l.b16 %v1407
    %v1575 = vunpack.c.l.b16 %v1408
    %v1576 = vunpack.c.l.b16 %v1409
    %v1577 = vunpack.c.l.b16 %v1410
    %v1578 = vunpack.c.l.b16 %v1411
    %v1579 = vunpack.c.l.b16 %v1412
    %v1580 = vunpack.c.l.b16 %v1413
    %v1581 = vunpack.c.l.b16 %v1414
    %v1582 = vunpack.c.l.b16 %v1415
    %v1583 = vunpack.c.l.b16 %v1416
    %v1584 = vunpack.c.l.b16 %v1417
    %v1585 = vunpack.c.l.b16 %v1418
    %v1586 = vunpack.c.l.b16 %v1419
    %v1587 = vunpack.c.l.b16 %v1420
    %v1588 = vunpack.c.l.b16 %v1421
    %v1589 = vunpack.c.l.b16 %v1422
    %v1590 = vunpack.c.l.b16 %v1423
    %v1591 = vunpack.c.l.b16 %v1424
    %v1592 = vunpack.c.l.b16 %v1425
    %v1593 = vunpack.c.l.b16 %v1426
    %v1594 = vunpack.c.l.b16 %v1427
    %v1595 = vunpack.c.l.b16 %v1428
    %v1596 = vunpack.c.l.b16 %v1429
    %v1597 = vunpack.c.l.b16 %v1430
    %v1598 = vunpack.c.l.b16 %v1431
    %v1599 = vunpack.c.l.b16 %v1432
    %v1600 = vunpack.c.l.b16 %v1433
    %v1601 = vunpack.c.l.b16 %v1434
    %v1602 = vunpack.c.l.b16 %v1435
    %v1603 = vunpack.c.l.b16 %v1436
    %v1604 = vunpack.c.l.b16 %v1437
    %v1605 = vunpack.c.l.b16 %v1438
    %v1606 = vunpack.c.l.b16 %v1439
    %v1607 = vunpack.c.l.b16 %v1440
    %v1608 = vunpack.c.l.b16 %v1441
    %v1609 = vunpack.c.l.b16 %v1442
    %v1610 = vunpack.c.l.b16 %v1443
    %v1611 = vunpack.c.l.b16 %v1444
    %v1612 = vpack.c.b16 %v1533, %v1532
    %v1613 = vpack.c.b16 %v1535, %v1534
    %v1614 = vpack.c.b16 %v1537, %v1536
    %v1615 = vpack.c.b16 %v1539, %v1538
    %v1616 = vpack.c.b16 %v1541, %v1540
    %v1617 = vpack.c.b16 %v1543, %v1542
    %v1618 = vpack.c.b16 %v1545, %v1544
    %v1619 = vpack.c.b16 %v1547, %v1546
    %v1620 = vpack.c.b16 %v1549, %v1548
    %v1621 = vpack.c.b16 %v1551, %v1550
    %v1622 = vpack.c.b16 %v1553, %v1552
    %v1623 = vpack.c.b16 %v1555, %v1554
    %v1624 = vpack.c.b16 %v1557, %v1556
    %v1625 = vpack.c.b16 %v1559, %v1558
    %v1626 = vpack.c.b16 %v1561, %v1560
    %v1627 = vpack.c.b16 %v1563, %v1562
    %v1628 = vpack.c.b16 %v1565, %v1564
    %v1629 = vpack.c.b16 %v1567, %v1566
    %v1630 = vpack.c.b16 %v1569, %v1568
    %v1631 = vpack.c.b16 %v1571, %v1570
    %v1632 = vpack.c.b16 %v1573, %v1572
    %v1633 = vpack.c.b16 %v1575, %v1574
    %v1634 = vpack.c.b16 %v1577, %v1576
    %v1635 = vpack.c.b16 %v1579, %v1578
    %v1636 = vpack.c.b16 %v1581, %v1580
    %v1637 = vpack.c.b16 %v1583, %v1582
    %v1638 = vpack.c.b16 %v1585, %v1584
    %v1639 = vpack.c.b16 %v1587, %v1586
    %v1640 = vpack.c.b16 %v1589, %v1588
    %v1641 = vpack.c.b16 %v1591, %v1590
    %v1642 = vpack.c.b16 %v1593, %v1592
    %v1643 = vpack.c.b16 %v1595, %v1594
    %v1644 = vpack.c.b16 %v1597, %v1596
    %v1645 = vpack.c.b16 %v1599, %v1598
    %v1646 = vpack.c.b16 %v1601, %v1600
    %v1647 = vpack.c.b16 %v1603, %v1602
    %v1648 = vpack.c.b16 %v1605, %v1604
    %v1649 = vpack.c.b16 %v1607, %v1606
    %v1650 = vpack.c.b16 %v1609, %v1608
    %v1651 = vpack.c.b16 %v1611, %v1610
    %1692 = vmatprep.subr.bf16.mxu0 0
    %1693 = vmatpush1.bf16.msra.mxu0 %v1619
    %1694 = vmatprep.subr.bf16.mxu0 0
    %1695 = vmatpush1.bf16.msra.mxu0 %v1618
    %1696 = vmatprep.subr.bf16.mxu0 0
    %1697 = vmatpush1.bf16.msra.mxu0 %v1617
    %1698 = vmatprep.subr.bf16.mxu0 0
    %1699 = vmatpush1.bf16.msra.mxu0 %v1616
    %1700 = vmatprep.subr.bf16.mxu0 0
    %1701 = vmatpush1.bf16.msra.mxu0 %v1615
    %1702 = vmatprep.subr.bf16.mxu0 0
    %1703 = vmatpush1.bf16.msra.mxu0 %v1614
    %1704 = vmatprep.subr.bf16.mxu0 0
    %1705 = vmatpush1.bf16.msra.mxu0 %v1613
    %1706 = vmatprep.subr.bf16.mxu0 0
    %1707 = vmatpush1.bf16.msra.mxu0 %v1612
    %1708 = vmatprep.subr.bf16.mxu0 0
    %1709 = vmatpush2.bf16.msra.mxu0 %v1627
    %1710 = vmatprep.subr.bf16.mxu0 0
    %1711 = vmatpush2.bf16.msra.mxu0 %v1626
    %1712 = vmatprep.subr.bf16.mxu0 0
    %1713 = vmatpush2.bf16.msra.mxu0 %v1625
    %1714 = vmatprep.subr.bf16.mxu0 0
    %1715 = vmatpush2.bf16.msra.mxu0 %v1624
    %1716 = vmatprep.subr.bf16.mxu0 0
    %1717 = vmatpush2.bf16.msra.mxu0 %v1623
    %1718 = vmatprep.subr.bf16.mxu0 0
    %1719 = vmatpush2.bf16.msra.mxu0 %v1622
    %1720 = vmatprep.subr.bf16.mxu0 0
    %1721 = vmatpush2.bf16.msra.mxu0 %v1621
    %1722 = vmatprep.subr.bf16.mxu0 0
    %1723 = vmatpush2.bf16.msra.mxu0 %v1620
    %1724 = vmatprep.mubr.bf16.mxu0 %v1361
    %1725 = vmatmul.mubr.bf16.gmra.mxu0 %v1360
    %v1726 = vpop.f32.mrf.mxu0
    %v1727 = vadd.f32 %v1450, %v1726
    %v1728 = vpop.f32.mrf.mxu0
    %v1729 = vpop.f32.mrf.mxu0
    %v1730 = vpop.f32.mrf.mxu0
    %1731 = vdwg.mxu0
    %1732 = vmatprep.subr.bf16.mxu0 0
    %1733 = vmatpush1.bf16.msra.mxu0 %v1635
    %1734 = vmatprep.subr.bf16.mxu0 0
    %1735 = vmatpush1.bf16.msra.mxu0 %v1634
    %1736 = vmatprep.subr.bf16.mxu0 0
    %1737 = vmatpush1.bf16.msra.mxu0 %v1633
    %1738 = vmatprep.subr.bf16.mxu0 0
    %1739 = vmatpush1.bf16.msra.mxu0 %v1632
    %1740 = vmatprep.subr.bf16.mxu0 0
    %1741 = vmatpush1.bf16.msra.mxu0 %v1631
    %1742 = vmatprep.subr.bf16.mxu0 0
    %1743 = vmatpush1.bf16.msra.mxu0 %v1630
    %1744 = vmatprep.subr.bf16.mxu0 0
    %1745 = vmatpush1.bf16.msra.mxu0 %v1629
    %1746 = vmatprep.subr.bf16.mxu0 0
    %1747 = vmatpush1.bf16.msra.mxu0 %v1628
    %1748 = vmatprep.subr.bf16.mxu0 0
    %1749 = vmatpush2.bf16.msra.mxu0 %v1643
    %1750 = vmatprep.subr.bf16.mxu0 0
    %1751 = vmatpush2.bf16.msra.mxu0 %v1642
    %1752 = vmatprep.subr.bf16.mxu0 0
    %1753 = vmatpush2.bf16.msra.mxu0 %v1641
    %1754 = vmatprep.subr.bf16.mxu0 0
    %1755 = vmatpush2.bf16.msra.mxu0 %v1640
    %1756 = vmatprep.subr.bf16.mxu0 0
    %1757 = vmatpush2.bf16.msra.mxu0 %v1639
    %1758 = vmatprep.subr.bf16.mxu0 0
    %1759 = vmatpush2.bf16.msra.mxu0 %v1638
    %1760 = vmatprep.subr.bf16.mxu0 0
    %1761 = vmatpush2.bf16.msra.mxu0 %v1637
    %1762 = vmatprep.subr.bf16.mxu0 0
    %1763 = vmatpush2.bf16.msra.mxu0 %v1636
    %1764 = vmatprep.mubr.bf16.mxu0 %v1363
    %1765 = vmatmul.mubr.bf16.gmra.mxu0 %v1362
    %v1766 = vpop.f32.mrf.mxu0
    %v1767 = vadd.f32 %v1727, %v1766
    %v1768 = vpop.f32.mrf.mxu0
    %v1769 = vpop.f32.mrf.mxu0
    %v1770 = vpop.f32.mrf.mxu0
    %1771 = vdwg.mxu0
    %1772 = vmatprep.subr.bf16.mxu0 0
    %1773 = vmatpush1.bf16.msra.mxu0 %v1651
    %1774 = vmatprep.subr.bf16.mxu0 0
    %1775 = vmatpush1.bf16.msra.mxu0 %v1650
    %1776 = vmatprep.subr.bf16.mxu0 0
    %1777 = vmatpush1.bf16.msra.mxu0 %v1649
    %1778 = vmatprep.subr.bf16.mxu0 0
    %1779 = vmatpush1.bf16.msra.mxu0 %v1648
    %1780 = vmatprep.subr.bf16.mxu0 0
    %1781 = vmatpush1.bf16.msra.mxu0 %v1647
    %1782 = vmatprep.subr.bf16.mxu0 0
    %1783 = vmatpush1.bf16.msra.mxu0 %v1646
    %1784 = vmatprep.subr.bf16.mxu0 0
    %1785 = vmatpush1.bf16.msra.mxu0 %v1645
    %1786 = vmatprep.subr.bf16.mxu0 0
    %1787 = vmatpush1.bf16.msra.mxu0 %v1644
    %1788 = vmatprep.subr.bf16.mxu0 0
    %1789 = vmatpush2.bf16.msra.mxu0 0
    %1790 = vmatprep.subr.bf16.mxu0 0
    %1791 = vmatpush2.bf16.msra.mxu0 0
    %1792 = vmatprep.subr.bf16.mxu0 0
    %1793 = vmatpush2.bf16.msra.mxu0 0
    %1794 = vmatprep.subr.bf16.mxu0 0
    %1795 = vmatpush2.bf16.msra.mxu0 0
    %1796 = vmatprep.subr.bf16.mxu0 0
    %1797 = vmatpush2.bf16.msra.mxu0 0
    %1798 = vmatprep.subr.bf16.mxu0 0
    %1799 = vmatpush2.bf16.msra.mxu0 0
    %1800 = vmatprep.subr.bf16.mxu0 0
    %1801 = vmatpush2.bf16.msra.mxu0 0
    %1802 = vmatprep.subr.bf16.mxu0 0
    %1803 = vmatpush2.bf16.msra.mxu0 0
    %1804 = vmatprep.mubr.bf16.mxu0 0
    %1805 = vmatmul.mubr.bf16.gmra.mxu0 %v1364
    %v1806 = vpop.f32.mrf.mxu0
    %v1807 = vadd.f32 %v1767, %v1806
    %v1808 = vpop.f32.mrf.mxu0
    %v1809 = vpop.f32.mrf.mxu0
    %v1810 = vpop.f32.mrf.mxu0
    %1811 = vdwg.mxu0
    %v1812 = vld [vmem:[%s7] sm:$0x1]
    %v1813 = vld [vmem:[%s8] sm:$0x1]
    %v1814 = vrot.slane %v1807, 4
    %v1815 = vadd.f32 %v1807, %v1814
    %v1816 = vrot.slane %v1815, 2
    %v1817 = vadd.f32 %v1815, %v1816
    %v1818 = vrot.slane %v1817, 1
    %v1819 = vadd.f32 %v1817, %v1818
    %v1820 = vrcp.pop 8.0
    %v1821 = vmul.f32 %v1819, %v1820
    %v1822 = vsub.f32 %v1807, %v1821
    %v1823 = vmul.f32 %v1822, %v1822
    %v1824 = vrot.slane %v1823, 4
    %v1825 = vadd.f32 %v1823, %v1824
    %v1826 = vrot.slane %v1825, 2
    %v1827 = vadd.f32 %v1825, %v1826
    %v1828 = vrot.slane %v1827, 1
    %v1829 = vadd.f32 %v1827, %v1828
    %v1830 = vmul.f32 %v1829, %v1820
    %v1831 = vadd.f32 %v1830, 1e-05
    %v1832 = vrsqrt.pop %v1831
    %v1833 = vmul.f32 %v1822, %v1832
    %v1835 = vlaneseq
    %v1836 = vshrl.u32 %v1835, 7
    %v1837 = vsub.s32 0, %v1836
    %v1838 = vrot.slane %v1812, %v1837
    %v1840 = vmul.f32 %v1833, %v1838
    %v1842 = vlaneseq
    %v1843 = vshrl.u32 %v1842, 7
    %v1844 = vsub.s32 0, %v1843
    %v1845 = vrot.slane %v1813, %v1844
    %v1847 = vadd.f32 %v1840, %v1845
    %v1848 = vmax.f32 %v1847, 0.0
    %v1849 = vpack.c.bf16 %v1848, %v1848
    %v1850 = vld [vmem:[%s9] sm:$0xf]
    %v1851 = vld [vmem:[%s9 + $0x4] sm:$0xf]
    %v1852 = vld [vmem:[%s9 + $0x8] sm:$0xf]
    %v1853 = vld [vmem:[%s9 + $0xc] sm:$0xf]
    %v1854 = vld [vmem:[%s9 + $0x10] sm:$0xf]
    %v1855 = vld [vmem:[%s9 + $0x14] sm:$0xf]
    %v1856 = vld [vmem:[%s9 + $0x18] sm:$0xf]
    %v1857 = vld [vmem:[%s9 + $0x1c] sm:$0xf]
    %v1858 = vld [vmem:[%s9 + $0x20] sm:$0xf]
    %v1859 = vld [vmem:[%s9 + $0x24] sm:$0xf]
    %v1860 = vld [vmem:[%s9 + $0x28] sm:$0xf]
    %v1861 = vld [vmem:[%s9 + $0x2c] sm:$0xf]
    %v1862 = vld [vmem:[%s9 + $0x30] sm:$0xf]
    %v1863 = vld [vmem:[%s9 + $0x34] sm:$0xf]
    %v1864 = vld [vmem:[%s9 + $0x38] sm:$0xf]
    %v1865 = vld [vmem:[%s9 + $0x3c] sm:$0xf]
    %v1866 = vld [vmem:[%s10] sm:$0x1]
    %v1868 = vlaneseq
    %v1869 = vshrl.u32 %v1868, 7
    %v1870 = vsub.s32 0, %v1869
    %v1871 = vrot.slane %v1866, %v1870
    %v1889 = vunpack.c.l.b16 %v1850
    %v1890 = vunpack.c.l.b16 %v1851
    %v1891 = vunpack.c.l.b16 %v1852
    %v1892 = vunpack.c.l.b16 %v1853
    %v1893 = vunpack.c.l.b16 %v1854
    %v1894 = vunpack.c.l.b16 %v1855
    %v1895 = vunpack.c.l.b16 %v1856
    %v1896 = vunpack.c.l.b16 %v1857
    %v1897 = vunpack.c.l.b16 %v1858
    %v1898 = vunpack.c.l.b16 %v1859
    %v1899 = vunpack.c.l.b16 %v1860
    %v1900 = vunpack.c.l.b16 %v1861
    %v1901 = vunpack.c.l.b16 %v1862
    %v1902 = vunpack.c.l.b16 %v1863
    %v1903 = vunpack.c.l.b16 %v1864
    %v1904 = vunpack.c.l.b16 %v1865
    %v1905 = vpack.c.b16 %v1890, %v1889
    %v1906 = vpack.c.b16 %v1892, %v1891
    %v1907 = vpack.c.b16 %v1894, %v1893
    %v1908 = vpack.c.b16 %v1896, %v1895
    %v1909 = vpack.c.b16 %v1898, %v1897
    %v1910 = vpack.c.b16 %v1900, %v1899
    %v1911 = vpack.c.b16 %v1902, %v1901
    %v1912 = vpack.c.b16 %v1904, %v1903
    %1921 = vmatprep.subr.bf16.mxu0 0
    %1922 = vmatpush1.bf16.msra.mxu0 %v1912
    %1923 = vmatprep.subr.bf16.mxu0 0
    %1924 = vmatpush1.bf16.msra.mxu0 %v1911
    %1925 = vmatprep.subr.bf16.mxu0 0
    %1926 = vmatpush1.bf16.msra.mxu0 %v1910
    %1927 = vmatprep.subr.bf16.mxu0 0
    %1928 = vmatpush1.bf16.msra.mxu0 %v1909
    %1929 = vmatprep.subr.bf16.mxu0 0
    %1930 = vmatpush1.bf16.msra.mxu0 %v1908
    %1931 = vmatprep.subr.bf16.mxu0 0
    %1932 = vmatpush1.bf16.msra.mxu0 %v1907
    %1933 = vmatprep.subr.bf16.mxu0 0
    %1934 = vmatpush1.bf16.msra.mxu0 %v1906
    %1935 = vmatprep.subr.bf16.mxu0 0
    %1936 = vmatpush1.bf16.msra.mxu0 %v1905
    %1937 = vmatprep.subr.bf16.mxu0 0
    %1938 = vmatpush2.bf16.msra.mxu0 0
    %1939 = vmatprep.subr.bf16.mxu0 0
    %1940 = vmatpush2.bf16.msra.mxu0 0
    %1941 = vmatprep.subr.bf16.mxu0 0
    %1942 = vmatpush2.bf16.msra.mxu0 0
    %1943 = vmatprep.subr.bf16.mxu0 0
    %1944 = vmatpush2.bf16.msra.mxu0 0
    %1945 = vmatprep.subr.bf16.mxu0 0
    %1946 = vmatpush2.bf16.msra.mxu0 0
    %1947 = vmatprep.subr.bf16.mxu0 0
    %1948 = vmatpush2.bf16.msra.mxu0 0
    %1949 = vmatprep.subr.bf16.mxu0 0
    %1950 = vmatpush2.bf16.msra.mxu0 0
    %1951 = vmatprep.subr.bf16.mxu0 0
    %1952 = vmatpush2.bf16.msra.mxu0 0
    %1953 = vmatprep.mubr.bf16.mxu0 0
    %1954 = vmatmul.mubr.bf16.gmra.mxu0 %v1849
    %v1955 = vpop.f32.mrf.mxu0
    %v1956 = vadd.f32 %v1871, %v1955
    %v1957 = vpop.f32.mrf.mxu0
    %v1958 = vpop.f32.mrf.mxu0
    %v1959 = vpop.f32.mrf.mxu0
    %1960 = vdwg.mxu0
    %v1961 = vld [vmem:[%s11] sm:$0x1]
    %v1962 = vld [vmem:[%s12] sm:$0x1]
    %v1963 = vrot.slane %v1956, 4
    %v1964 = vadd.f32 %v1956, %v1963
    %v1965 = vrot.slane %v1964, 2
    %v1966 = vadd.f32 %v1964, %v1965
    %v1967 = vrot.slane %v1966, 1
    %v1968 = vadd.f32 %v1966, %v1967
    %v1969 = vmul.f32 %v1968, %v1820
    %v1970 = vsub.f32 %v1956, %v1969
    %v1971 = vmul.f32 %v1970, %v1970
    %v1972 = vrot.slane %v1971, 4
    %v1973 = vadd.f32 %v1971, %v1972
    %v1974 = vrot.slane %v1973, 2
    %v1975 = vadd.f32 %v1973, %v1974
    %v1976 = vrot.slane %v1975, 1
    %v1977 = vadd.f32 %v1975, %v1976
    %v1978 = vmul.f32 %v1977, %v1820
    %v1979 = vadd.f32 %v1978, 1e-05
    %v1980 = vrsqrt.pop %v1979
    %v1981 = vmul.f32 %v1970, %v1980
    %v1983 = vlaneseq
    %v1984 = vshrl.u32 %v1983, 7
    %v1985 = vsub.s32 0, %v1984
    %v1986 = vrot.slane %v1961, %v1985
    %v1988 = vmul.f32 %v1981, %v1986
    %v1990 = vlaneseq
    %v1991 = vshrl.u32 %v1990, 7
    %v1992 = vsub.s32 0, %v1991
    %v1993 = vrot.slane %v1962, %v1992
    %v1995 = vadd.f32 %v1988, %v1993
    %v1996 = vmax.f32 %v1995, 0.0
    %v1997 = vpack.c.bf16 %v1996, %v1996
    %v1998 = vld [vmem:[%s13] sm:$0xf]
    %v1999 = vld [vmem:[%s13 + $0x4] sm:$0xf]
    %v2000 = vld [vmem:[%s13 + $0x8] sm:$0xf]
    %v2001 = vld [vmem:[%s13 + $0xc] sm:$0xf]
    %v2002 = vld [vmem:[%s13 + $0x10] sm:$0xf]
    %v2003 = vld [vmem:[%s13 + $0x14] sm:$0xf]
    %v2004 = vld [vmem:[%s13 + $0x18] sm:$0xf]
    %v2005 = vld [vmem:[%s13 + $0x1c] sm:$0xf]
    %v2006 = vld [vmem:[%s13 + $0x20] sm:$0xf]
    %v2007 = vld [vmem:[%s13 + $0x24] sm:$0xf]
    %v2008 = vld [vmem:[%s13 + $0x28] sm:$0xf]
    %v2009 = vld [vmem:[%s13 + $0x2c] sm:$0xf]
    %v2010 = vld [vmem:[%s13 + $0x30] sm:$0xf]
    %v2011 = vld [vmem:[%s13 + $0x34] sm:$0xf]
    %v2012 = vld [vmem:[%s13 + $0x38] sm:$0xf]
    %v2013 = vld [vmem:[%s13 + $0x3c] sm:$0xf]
    %v2014 = vld [vmem:[%s14] sm:$0x1]
    %v2016 = vlaneseq
    %v2017 = vshrl.u32 %v2016, 7
    %v2018 = vsub.s32 0, %v2017
    %v2019 = vrot.slane %v2014, %v2018
    %v2037 = vunpack.c.l.b16 %v1998
    %v2038 = vunpack.c.l.b16 %v1999
    %v2039 = vunpack.c.l.b16 %v2000
    %v2040 = vunpack.c.l.b16 %v2001
    %v2041 = vunpack.c.l.b16 %v2002
    %v2042 = vunpack.c.l.b16 %v2003
    %v2043 = vunpack.c.l.b16 %v2004
    %v2044 = vunpack.c.l.b16 %v2005
    %v2045 = vunpack.c.l.b16 %v2006
    %v2046 = vunpack.c.l.b16 %v2007
    %v2047 = vunpack.c.l.b16 %v2008
    %v2048 = vunpack.c.l.b16 %v2009
    %v2049 = vunpack.c.l.b16 %v2010
    %v2050 = vunpack.c.l.b16 %v2011
    %v2051 = vunpack.c.l.b16 %v2012
    %v2052 = vunpack.c.l.b16 %v2013
    %v2053 = vpack.c.b16 %v2038, %v2037
    %v2054 = vpack.c.b16 %v2040, %v2039
    %v2055 = vpack.c.b16 %v2042, %v2041
    %v2056 = vpack.c.b16 %v2044, %v2043
    %v2057 = vpack.c.b16 %v2046, %v2045
    %v2058 = vpack.c.b16 %v2048, %v2047
    %v2059 = vpack.c.b16 %v2050, %v2049
    %v2060 = vpack.c.b16 %v2052, %v2051
    %2069 = vmatprep.subr.bf16.mxu0 0
    %2070 = vmatpush1.bf16.msra.mxu0 %v2060
    %2071 = vmatprep.subr.bf16.mxu0 0
    %2072 = vmatpush1.bf16.msra.mxu0 %v2059
    %2073 = vmatprep.subr.bf16.mxu0 0
    %2074 = vmatpush1.bf16.msra.mxu0 %v2058
    %2075 = vmatprep.subr.bf16.mxu0 0
    %2076 = vmatpush1.bf16.msra.mxu0 %v2057
    %2077 = vmatprep.subr.bf16.mxu0 0
    %2078 = vmatpush1.bf16.msra.mxu0 %v2056
    %2079 = vmatprep.subr.bf16.mxu0 0
    %2080 = vmatpush1.bf16.msra.mxu0 %v2055
    %2081 = vmatprep.subr.bf16.mxu0 0
    %2082 = vmatpush1.bf16.msra.mxu0 %v2054
    %2083 = vmatprep.subr.bf16.mxu0 0
    %2084 = vmatpush1.bf16.msra.mxu0 %v2053
    %2085 = vmatprep.subr.bf16.mxu0 0
    %2086 = vmatpush2.bf16.msra.mxu0 0
    %2087 = vmatprep.subr.bf16.mxu0 0
    %2088 = vmatpush2.bf16.msra.mxu0 0
    %2089 = vmatprep.subr.bf16.mxu0 0
    %2090 = vmatpush2.bf16.msra.mxu0 0
    %2091 = vmatprep.subr.bf16.mxu0 0
    %2092 = vmatpush2.bf16.msra.mxu0 0
    %2093 = vmatprep.subr.bf16.mxu0 0
    %2094 = vmatpush2.bf16.msra.mxu0 0
    %2095 = vmatprep.subr.bf16.mxu0 0
    %2096 = vmatpush2.bf16.msra.mxu0 0
    %2097 = vmatprep.subr.bf16.mxu0 0
    %2098 = vmatpush2.bf16.msra.mxu0 0
    %2099 = vmatprep.subr.bf16.mxu0 0
    %2100 = vmatpush2.bf16.msra.mxu0 0
    %2101 = vmatprep.mubr.bf16.mxu0 0
    %2102 = vmatmul.mubr.bf16.gmra.mxu0 %v1997
    %v2103 = vpop.f32.mrf.mxu0
    %v2104 = vadd.f32 %v2019, %v2103
    %v2105 = vpop.f32.mrf.mxu0
    %v2106 = vpop.f32.mrf.mxu0
    %v2107 = vpop.f32.mrf.mxu0
    %2108 = vdwg.mxu0
    %2109 = vst [vmem:[#allocation2] sm:$0xff] %v2104
    // Predicated region
    $region62: #{lenet_forward.1} parent=1 // pred_check
      _
    $region63: #{lenet_forward.1} parent=1 // pred_check_branch
      %2111 = sbr.rel (0) target = $region65
    $region64: #{lenet_forward.1} parent=1 // pred_region
      %s2113 = ssub.s32 128, 128
      %2114 = vsyncadd [#allocation3], %s2113
      %s2116 = sshll.u32 [#allocation2], 4
      %s2117 = int_to_ptr.vmem [resolvable:$true] %s2116
      %2119 = dma.vmem_to_hbm [thread:$0]  %s2117, 128, %s15, [#allocation3]
    $region65: #{lenet_forward.1} parent=1 // pred_fallthru
      _
    // Predicated region
    $region66: #{lenet_forward.1} parent=1 // pred_check
      _
    $region67: #{lenet_forward.1} parent=1 // pred_check_branch
      %2121 = sbr.rel (0) target = $region69
    $region68: #{lenet_forward.1} parent=1 // pred_region
      %2122 = dma.done [#allocation3], 128
    $region69: #{lenet_forward.1} parent=1 // pred_fallthru
      _
    %2123 = vsyncpa [#allocation3], 1

</llo_original>
